<compile_context>
chip_gen: v7x
topology: tpu7x:2x2x1
jax: 0.10.0
libtpu: 0.0.40
codegen_flags: <defaults>
</compile_context>

<pallas_src>
import math
from functools import partial

import jax
import jax.numpy as jnp
from jax import lax
from jax.experimental import pallas as pl
from jax.experimental.pallas import tpu as pltpu

LN_EPS = 1e-12  # config.layer_norm_eps

# Scoped VMEM budget: raised above the 16/32 MiB defaults on v5e/v6e, but kept under the
# 64 MiB physical VMEM of v7x (with headroom for compiler-internal scratch).
_VMEM_LIMIT = 48 * 1024 * 1024

# Preferred GEMM tile sizes (clamped / divisor-adjusted per actual dims below).
_TM, _TN, _TK = 256, 256, 512


# ----------------------------------------------------------------------------
# in-kernel math helpers
# ----------------------------------------------------------------------------
def _erf(x):
    # Numerical-Recipes erfc-based erf approximation (abs error < 1.5e-7, i.e. fp32
    # precision) built only from ops Mosaic lowers (exp/mul/add/select).
    # TODO(synk): switch to a tanh-GELU or a native erf primitive if exact-erf fidelity
    # to the PyTorch reference is not required (frees VALU slots on the GEMM epilogue).
    a = jnp.abs(x)
    t = 1.0 / (1.0 + 0.5 * a)
    poly = -1.26551223 + t * (1.00002368 + t * (0.37409196 + t * (0.09678418 +
           t * (-0.18628806 + t * (0.27886807 + t * (-1.13520398 + t * (1.48851587 +
           t * (-0.82215223 + t * 0.17087277))))))))
    erfc = t * jnp.exp(-a * a + poly)
    return jnp.where(x >= 0.0, 1.0 - erfc, erfc - 1.0)


def _gelu(x):
    # exact (erf-based) gelu, as in the reference module
    return x * 0.5 * (1.0 + _erf(x / math.sqrt(2.0)))


def _pick_tile(dim, preferred, align):
    """Largest multiple of `align` <= preferred that evenly divides dim, else full dim."""
    if dim <= preferred:
        return dim
    t = (preferred // align) * align
    while t >= align:
        if dim % t == 0:
            return t
        t -= align
    return dim


# ----------------------------------------------------------------------------
# Pallas kernels
# ----------------------------------------------------------------------------
def _matmul_bias_kernel(x_ref, w_ref, b_ref, o_ref, acc_ref, *, act):
    """Tiled GEMM with bias (+ optional GELU) epilogue. grid = (M//tm, N//tn, K//tk)."""
    @pl.when(pl.program_id(2) == 0)
    def _():
        acc_ref[...] = jnp.zeros_like(acc_ref)

    acc_ref[...] += jnp.dot(x_ref[...], w_ref[...],
                            preferred_element_type=jnp.float32)

    @pl.when(pl.program_id(2) == pl.num_programs(2) - 1)
    def _():
        y = acc_ref[...] + b_ref[...]
        if act == "gelu":
            y = _gelu(y)
        o_ref[...] = y.astype(o_ref.dtype)


def _matmul_bias_res_ln_kernel(x_ref, w_ref, b_ref, res_ref, g_ref, beta_ref,
                               o_ref, acc_ref):
    """Tiled GEMM fused with (bias + residual add + TF-style LayerNorm) epilogue.

    grid = (M//tm, K//tk); N (= hidden) is kept whole so LayerNorm can reduce over it.
    """
    @pl.when(pl.program_id(1) == 0)
    def _():
        acc_ref[...] = jnp.zeros_like(acc_ref)

    acc_ref[...] += jnp.dot(x_ref[...], w_ref[...],
                            preferred_element_type=jnp.float32)

    @pl.when(pl.program_id(1) == pl.num_programs(1) - 1)
    def _():
        y = acc_ref[...] + b_ref[...] + res_ref[...]
        u = jnp.mean(y, axis=-1, keepdims=True)
        s = jnp.mean((y - u) ** 2, axis=-1, keepdims=True)
        yn = (y - u) / jnp.sqrt(s + LN_EPS)
        o_ref[...] = (g_ref[...] * yn + beta_ref[...]).astype(o_ref.dtype)


def _attention_kernel(qkv_ref, mask_ref, o_ref, *, num_heads, head_dim, hidden):
    """Self-attention for one batch element, all heads, on lane-dense [S, 3H] layout.

    qkv_ref: [S, 3H] (Q | K | V along the hidden dim), mask_ref: [1, S] additive mask,
    o_ref: [S, H]. Heads are static lane slices; scores use a transposed-RHS dot_general
    so no K transpose is materialized.
    """
    inv_sqrt_dh = 1.0 / math.sqrt(head_dim)
    mask = mask_ref[...]  # [1, S], broadcasts over query rows

    # TODO(synk): for very long sequences, tile over KV (flash-style online softmax)
    # instead of materializing the full [S, S] score block per head.
    for h in range(num_heads):
        lo = h * head_dim
        hi = lo + head_dim
        q = qkv_ref[:, lo:hi]
        k = qkv_ref[:, hidden + lo:hidden + hi]
        v = qkv_ref[:, 2 * hidden + lo:2 * hidden + hi]

        scores = lax.dot_general(q, k, (((1,), (1,)), ((), ())),
                                 preferred_element_type=jnp.float32)
        scores = scores * inv_sqrt_dh + mask
        m = jnp.max(scores, axis=-1, keepdims=True)          # stable softmax (== torch)
        p = jnp.exp(scores - m)
        p = p / jnp.sum(p, axis=-1, keepdims=True)
        ctx = jnp.dot(p, v, preferred_element_type=jnp.float32)
        o_ref[:, lo:hi] = ctx.astype(o_ref.dtype)


# ----------------------------------------------------------------------------
# wrappers around pallas_call
# ----------------------------------------------------------------------------
def linear(x2d, w, b, activation=None):
    """y = act(x @ w + b), tiled over (M, N, K) with VMEM f32 accumulator."""
    M, K = x2d.shape
    _, N = w.shape
    tm = _pick_tile(M, _TM, 8)
    tn = _pick_tile(N, _TN, 128)
    tk = _pick_tile(K, _TK, 128)
    grid = (M // tm, N // tn, K // tk)
    kern = partial(_matmul_bias_kernel, act=activation)
    return pl.pallas_call(
        kern,
        grid=grid,
        in_specs=[pl.BlockSpec((tm, tk), lambda i, j, k: (i, k)),
                  pl.BlockSpec((tk, tn), lambda i, j, k: (k, j)),
                  pl.BlockSpec((1, tn), lambda i, j, k: (0, j))],
        out_specs=pl.BlockSpec((tm, tn), lambda i, j, k: (i, j)),
        out_shape=jax.ShapeDtypeStruct((M, N), jnp.float32),
        scratch_shapes=[pltpu.VMEM((tm, tn), jnp.float32)],
        compiler_params=pltpu.CompilerParams(
            dimension_semantics=("parallel", "parallel", "arbitrary"),
            vmem_limit_bytes=_VMEM_LIMIT),
    )(x2d, w, b.reshape(1, N))


def linear_add_ln(x2d, w, b, res2d, gamma, beta):
    """LayerNorm(x @ w + b + residual): GEMM with fused residual+LN epilogue."""
    M, K = x2d.shape
    _, N = w.shape
    tm = _pick_tile(M, _TM, 8)
    tk = _pick_tile(K, _TK, 128)
    grid = (M // tm, K // tk)
    return pl.pallas_call(
        _matmul_bias_res_ln_kernel,
        grid=grid,
        in_specs=[pl.BlockSpec((tm, tk), lambda i, k: (i, k)),
                  pl.BlockSpec((tk, N), lambda i, k: (k, 0)),
                  pl.BlockSpec((1, N), lambda i, k: (0, 0)),
                  pl.BlockSpec((tm, N), lambda i, k: (i, 0)),
                  pl.BlockSpec((1, N), lambda i, k: (0, 0)),
                  pl.BlockSpec((1, N), lambda i, k: (0, 0))],
        out_specs=pl.BlockSpec((tm, N), lambda i, k: (i, 0)),
        out_shape=jax.ShapeDtypeStruct((M, N), jnp.float32),
        scratch_shapes=[pltpu.VMEM((tm, N), jnp.float32)],
        compiler_params=pltpu.CompilerParams(
            dimension_semantics=("parallel", "arbitrary"),
            vmem_limit_bytes=_VMEM_LIMIT),
    )(x2d, w, b.reshape(1, N), res2d, gamma.reshape(1, N), beta.reshape(1, N))


def multihead_attention(qkv, ext_mask, *, num_heads, head_dim, hidden):
    """qkv: [B, S, 3H] (Q|K|V), ext_mask: [B, 1, S] additive. Returns ctx [B, S, H]."""
    B, S, threeH = qkv.shape
    kern = partial(_attention_kernel, num_heads=num_heads, head_dim=head_dim,
                   hidden=hidden)
    return pl.pallas_call(
        kern,
        grid=(B,),
        in_specs=[pl.BlockSpec((None, S, threeH), lambda b: (b, 0, 0)),
                  pl.BlockSpec((None, 1, S), lambda b: (b, 0, 0))],
        out_specs=pl.BlockSpec((None, S, hidden), lambda b: (b, 0, 0)),
        out_shape=jax.ShapeDtypeStruct((B, S, hidden), jnp.float32),
        compiler_params=pltpu.CompilerParams(
            dimension_semantics=("parallel",),
            vmem_limit_bytes=_VMEM_LIMIT),
    )(qkv, ext_mask)


# ----------------------------------------------------------------------------
# parameter init (matches init_Transformer_weights: N(0, 0.02) weights, zero biases,
# LayerNorm weight=1 / bias=0).  Q/K/V weights are stored pre-fused as [H, 3H].
# ----------------------------------------------------------------------------
def init_params(key, input_dim, hidden, inter, n_layers):
    keys = iter(jax.random.split(key, 4 * n_layers + 4))

    def lin(k, fan_in, fan_out):
        w = 0.02 * jax.random.normal(k, (fan_in, fan_out), jnp.float32)
        b = jnp.zeros((fan_out,), jnp.float32)
        return w, b

    params = {}
    params["spec_w"], params["spec_b"] = lin(next(keys), input_dim, hidden)
    params["in_ln_g"] = jnp.ones((hidden,), jnp.float32)
    params["in_ln_b"] = jnp.zeros((hidden,), jnp.float32)
    layers = []
    for _ in range(n_layers):
        lp = {}
        # fused [Wq | Wk | Wv]  (equivalent to three independent N(0, 0.02) Linears)
        lp["qkv_w"], lp["qkv_b"] = lin(next(keys), hidden, 3 * hidden)
        lp["ao_w"], lp["ao_b"] = lin(next(keys), hidden, hidden)
        lp["ao_ln_g"] = jnp.ones((hidden,), jnp.float32)
        lp["ao_ln_b"] = jnp.zeros((hidden,), jnp.float32)
        lp["i_w"], lp["i_b"] = lin(next(keys), hidden, inter)
        lp["o_w"], lp["o_b"] = lin(next(keys), inter, hidden)
        lp["o_ln_g"] = jnp.ones((hidden,), jnp.float32)
        lp["o_ln_b"] = jnp.zeros((hidden,), jnp.float32)
        layers.append(lp)
    params["layers"] = layers
    return params


# ----------------------------------------------------------------------------
# TransformerModel.forward (post-LN, with_input_module=True, eval mode)
# ----------------------------------------------------------------------------
def transformer_model_forward(params, spec_input, pos_enc, attention_mask, *,
                              num_heads):
    B, S, D_in = spec_input.shape
    H = params["spec_w"].shape[1]
    Dh = H // num_heads

    # extended_attention_mask = (1 - mask) * -10000, shaped [B, 1, S] (broadcast over
    # heads and query positions like [B,1,1,S] in the reference).
    ext_mask = ((1.0 - attention_mask.astype(jnp.float32)) * -10000.0
                ).reshape(B, 1, S)

    # --- input representations: LN(spec_transform(spec) + pos_enc), fused in one call
    x = spec_input.reshape(B * S, D_in)
    h = linear_add_ln(x, params["spec_w"], params["spec_b"],
                      pos_enc.reshape(B * S, H),
                      params["in_ln_g"], params["in_ln_b"])
    # dropout: identity in eval mode

    encoded = [h.reshape(B, S, H)]

    for lp in params["layers"]:
        # --- self attention: fused QKV projection, lane-dense [B, S, 3H] layout ---
        qkv = linear(h, lp["qkv_w"], lp["qkv_b"])                    # [B*S, 3H]
        ctx = multihead_attention(qkv.reshape(B, S, 3 * H), ext_mask,
                                  num_heads=num_heads, head_dim=Dh, hidden=H)
        ctx2d = ctx.reshape(B * S, H)
        # dropout on attention probs / hidden states: identity in eval mode
        # --- attention output: LN(dense(ctx) + h), fused epilogue ---
        attn_out = linear_add_ln(ctx2d, lp["ao_w"], lp["ao_b"], h,
                                 lp["ao_ln_g"], lp["ao_ln_b"])
        # --- feed forward: LN(dense(gelu(dense(attn_out))) + attn_out) ---
        inter = linear(attn_out, lp["i_w"], lp["i_b"], activation="gelu")
        h = linear_add_ln(inter, lp["o_w"], lp["o_b"], attn_out,
                          lp["o_ln_g"], lp["o_ln_b"])
        encoded.append(h.reshape(B, S, H))

    # output_all_encoded_layers=True -> [num_layers + 1, B, S, H]
    # TODO(synk): write each layer's output directly into a preallocated slab (or use
    # input_output_aliases) to avoid the extra HBM copy done by jnp.stack.
    return jnp.stack(encoded, axis=0)


# ----------------------------------------------------------------------------
if __name__ == "__main__":
    B, S = 2, 8
    INPUT_DIM = 16
    HIDDEN = 32
    NUM_HEADS = 4
    INTERMEDIATE = 64
    NUM_LAYERS = 2

    key = jax.random.PRNGKey(0)
    k_param, k_spec, k_pos = jax.random.split(key, 3)
    params = init_params(k_param, INPUT_DIM, HIDDEN, INTERMEDIATE, NUM_LAYERS)

    spec_input = jax.random.normal(k_spec, (B, S, INPUT_DIM), jnp.float32)
    pos_enc = jax.random.normal(k_pos, (B, S, HIDDEN), jnp.float32)
    attention_mask = jnp.ones((B, S), jnp.float32)  # [B, S] padding mask

    fwd = jax.jit(partial(transformer_model_forward, num_heads=NUM_HEADS))
    out = fwd(params, spec_input, pos_enc, attention_mask)
    jax.block_until_ready(out)
    assert out.shape == (NUM_LAYERS + 1, B, S, HIDDEN)
    print("KERNEL_OK")
</pallas_src>

<mosaic_0001>
module attributes {stable_mosaic.version = 11 : i64} {
  func.func @_attention_kernel(%arg0: i32, %arg1: memref<1x8x96xf32, #tpu.memory_space<vmem>>, %arg2: memref<1x1x8xf32, #tpu.memory_space<vmem>>, %arg3: memref<1x8x32xf32, #tpu.memory_space<vmem>>) attributes {dimension_semantics = [#tpu.dimension_semantics<parallel>], iteration_bounds = array<i64: 2>, scalar_prefetch = 0 : i64, scratch_operands = 0 : i64, tpu.core_type = #tpu.core_type<tc>, window_params = [{transform_indices = @transform_0, window_bounds = array<i64: 1, 8, 96>}, {transform_indices = @transform_1, window_bounds = array<i64: 1, 1, 8>}, {transform_indices = @transform_2, window_bounds = array<i64: 1, 8, 32>}]} {
    %c0 = arith.constant 0 : index
    %c0_0 = arith.constant 0 : index
    %c0_1 = arith.constant 0 : index
    %0 = vector.load %arg2[%c0, %c0_0, %c0_1] : memref<1x1x8xf32, #tpu.memory_space<vmem>>, vector<1x1x8xf32>
    %1 = vector.shape_cast %0 : vector<1x1x8xf32> to vector<1x8xf32>
    %c0_2 = arith.constant 0 : index
    %c0_3 = arith.constant 0 : index
    %c0_4 = arith.constant 0 : index
    %2 = vector.load %arg1[%c0_2, %c0_3, %c0_4] : memref<1x8x96xf32, #tpu.memory_space<vmem>>, vector<1x8x8xf32>
    %3 = vector.shape_cast %2 : vector<1x8x8xf32> to vector<8x8xf32>
    %c0_5 = arith.constant 0 : index
    %c0_6 = arith.constant 0 : index
    %c32 = arith.constant 32 : index
    %4 = vector.load %arg1[%c0_5, %c0_6, %c32] : memref<1x8x96xf32, #tpu.memory_space<vmem>>, vector<1x8x8xf32>
    %5 = vector.shape_cast %4 : vector<1x8x8xf32> to vector<8x8xf32>
    %c0_7 = arith.constant 0 : index
    %c0_8 = arith.constant 0 : index
    %c64 = arith.constant 64 : index
    %6 = vector.load %arg1[%c0_7, %c0_8, %c64] : memref<1x8x96xf32, #tpu.memory_space<vmem>>, vector<1x8x8xf32>
    %7 = vector.shape_cast %6 : vector<1x8x8xf32> to vector<8x8xf32>
    %cst = arith.constant dense<0.000000e+00> : vector<8x8xf32>
    %8 = tpu.matmul %3, %5, %cst {dimension_numbers = #tpu.dot_dimension_numbers<[1], [1], [0], [0], [0, 0, 1, 0], [], []>} : vector<8x8xf32>, vector<8x8xf32>, vector<8x8xf32> -> vector<8x8xf32>
    %cst_9 = arith.constant 0.353553385 : f32
    %9 = vector.broadcast %cst_9 : f32 to vector<8x8xf32>
    %10 = arith.mulf %8, %9 : vector<8x8xf32>
    %11 = vector.broadcast %1 : vector<1x8xf32> to vector<8x8xf32>
    %12 = arith.addf %10, %11 : vector<8x8xf32>
    %cst_10 = arith.constant dense<0xFF800000> : vector<8xf32>
    %13 = vector.multi_reduction <maximumf>, %12, %cst_10 [1] : vector<8x8xf32> to vector<8xf32>
    %14 = vector.shape_cast %13 : vector<8xf32> to vector<8x1xf32>
    %15 = vector.broadcast %14 : vector<8x1xf32> to vector<8x8xf32>
    %16 = arith.subf %12, %15 : vector<8x8xf32>
    %17 = math.exp %16 : vector<8x8xf32>
    %cst_11 = arith.constant dense<0.000000e+00> : vector<8xf32>
    %18 = vector.multi_reduction <add>, %17, %cst_11 [1] : vector<8x8xf32> to vector<8xf32>
    %19 = vector.shape_cast %18 : vector<8xf32> to vector<8x1xf32>
    %20 = vector.broadcast %19 : vector<8x1xf32> to vector<8x8xf32>
    %21 = arith.divf %17, %20 : vector<8x8xf32>
    %cst_12 = arith.constant dense<0.000000e+00> : vector<8x8xf32>
    %22 = tpu.matmul %21, %7, %cst_12 {dimension_numbers = #tpu.dot_dimension_numbers<[1], [0], [0], [1], [0, 0, 1, 1], [], []>} : vector<8x8xf32>, vector<8x8xf32>, vector<8x8xf32> -> vector<8x8xf32>
    %c0_13 = arith.constant 0 : index
    %c0_14 = arith.constant 0 : index
    %c0_15 = arith.constant 0 : index
    %23 = vector.load %arg3[%c0_13, %c0_14, %c0_15] : memref<1x8x32xf32, #tpu.memory_space<vmem>>, vector<1x8x8xf32>
    %24 = vector.shape_cast %23 : vector<1x8x8xf32> to vector<8x8xf32>
    %25 = vector.shape_cast %22 : vector<8x8xf32> to vector<1x8x8xf32>
    tpu.vector_store %arg3[%c0_13, %c0_14, %c0_15], %25 {strides = array<i32>} : memref<1x8x32xf32, #tpu.memory_space<vmem>>, vector<1x8x8xf32>,
    %c0_16 = arith.constant 0 : index
    %c0_17 = arith.constant 0 : index
    %c8 = arith.constant 8 : index
    %26 = vector.load %arg1[%c0_16, %c0_17, %c8] : memref<1x8x96xf32, #tpu.memory_space<vmem>>, vector<1x8x8xf32>
    %27 = vector.shape_cast %26 : vector<1x8x8xf32> to vector<8x8xf32>
    %c0_18 = arith.constant 0 : index
    %c0_19 = arith.constant 0 : index
    %c40 = arith.constant 40 : index
    %28 = vector.load %arg1[%c0_18, %c0_19, %c40] : memref<1x8x96xf32, #tpu.memory_space<vmem>>, vector<1x8x8xf32>
    %29 = vector.shape_cast %28 : vector<1x8x8xf32> to vector<8x8xf32>
    %c0_20 = arith.constant 0 : index
    %c0_21 = arith.constant 0 : index
    %c72 = arith.constant 72 : index
    %30 = vector.load %arg1[%c0_20, %c0_21, %c72] : memref<1x8x96xf32, #tpu.memory_space<vmem>>, vector<1x8x8xf32>
    %31 = vector.shape_cast %30 : vector<1x8x8xf32> to vector<8x8xf32>
    %cst_22 = arith.constant dense<0.000000e+00> : vector<8x8xf32>
    %32 = tpu.matmul %27, %29, %cst_22 {dimension_numbers = #tpu.dot_dimension_numbers<[1], [1], [0], [0], [0, 0, 1, 0], [], []>} : vector<8x8xf32>, vector<8x8xf32>, vector<8x8xf32> -> vector<8x8xf32>
    %cst_23 = arith.constant 0.353553385 : f32
    %33 = vector.broadcast %cst_23 : f32 to vector<8x8xf32>
    %34 = arith.mulf %32, %33 : vector<8x8xf32>
    %35 = vector.broadcast %1 : vector<1x8xf32> to vector<8x8xf32>
    %36 = arith.addf %34, %35 : vector<8x8xf32>
    %cst_24 = arith.constant dense<0xFF800000> : vector<8xf32>
    %37 = vector.multi_reduction <maximumf>, %36, %cst_24 [1] : vector<8x8xf32> to vector<8xf32>
    %38 = vector.shape_cast %37 : vector<8xf32> to vector<8x1xf32>
    %39 = vector.broadcast %38 : vector<8x1xf32> to vector<8x8xf32>
    %40 = arith.subf %36, %39 : vector<8x8xf32>
    %41 = math.exp %40 : vector<8x8xf32>
    %cst_25 = arith.constant dense<0.000000e+00> : vector<8xf32>
    %42 = vector.multi_reduction <add>, %41, %cst_25 [1] : vector<8x8xf32> to vector<8xf32>
    %43 = vector.shape_cast %42 : vector<8xf32> to vector<8x1xf32>
    %44 = vector.broadcast %43 : vector<8x1xf32> to vector<8x8xf32>
    %45 = arith.divf %41, %44 : vector<8x8xf32>
    %cst_26 = arith.constant dense<0.000000e+00> : vector<8x8xf32>
    %46 = tpu.matmul %45, %31, %cst_26 {dimension_numbers = #tpu.dot_dimension_numbers<[1], [0], [0], [1], [0, 0, 1, 1], [], []>} : vector<8x8xf32>, vector<8x8xf32>, vector<8x8xf32> -> vector<8x8xf32>
    %c0_27 = arith.constant 0 : index
    %c0_28 = arith.constant 0 : index
    %c8_29 = arith.constant 8 : index
    %47 = vector.load %arg3[%c0_27, %c0_28, %c8_29] : memref<1x8x32xf32, #tpu.memory_space<vmem>>, vector<1x8x8xf32>
    %48 = vector.shape_cast %47 : vector<1x8x8xf32> to vector<8x8xf32>
    %49 = vector.shape_cast %46 : vector<8x8xf32> to vector<1x8x8xf32>
    tpu.vector_store %arg3[%c0_27, %c0_28, %c8_29], %49 {strides = array<i32>} : memref<1x8x32xf32, #tpu.memory_space<vmem>>, vector<1x8x8xf32>,
    %c0_30 = arith.constant 0 : index
    %c0_31 = arith.constant 0 : index
    %c16 = arith.constant 16 : index
    %50 = vector.load %arg1[%c0_30, %c0_31, %c16] : memref<1x8x96xf32, #tpu.memory_space<vmem>>, vector<1x8x8xf32>
    %51 = vector.shape_cast %50 : vector<1x8x8xf32> to vector<8x8xf32>
    %c0_32 = arith.constant 0 : index
    %c0_33 = arith.constant 0 : index
    %c48 = arith.constant 48 : index
    %52 = vector.load %arg1[%c0_32, %c0_33, %c48] : memref<1x8x96xf32, #tpu.memory_space<vmem>>, vector<1x8x8xf32>
    %53 = vector.shape_cast %52 : vector<1x8x8xf32> to vector<8x8xf32>
    %c0_34 = arith.constant 0 : index
    %c0_35 = arith.constant 0 : index
    %c80 = arith.constant 80 : index
    %54 = vector.load %arg1[%c0_34, %c0_35, %c80] : memref<1x8x96xf32, #tpu.memory_space<vmem>>, vector<1x8x8xf32>
    %55 = vector.shape_cast %54 : vector<1x8x8xf32> to vector<8x8xf32>
    %cst_36 = arith.constant dense<0.000000e+00> : vector<8x8xf32>
    %56 = tpu.matmul %51, %53, %cst_36 {dimension_numbers = #tpu.dot_dimension_numbers<[1], [1], [0], [0], [0, 0, 1, 0], [], []>} : vector<8x8xf32>, vector<8x8xf32>, vector<8x8xf32> -> vector<8x8xf32>
    %cst_37 = arith.constant 0.353553385 : f32
    %57 = vector.broadcast %cst_37 : f32 to vector<8x8xf32>
    %58 = arith.mulf %56, %57 : vector<8x8xf32>
    %59 = vector.broadcast %1 : vector<1x8xf32> to vector<8x8xf32>
    %60 = arith.addf %58, %59 : vector<8x8xf32>
    %cst_38 = arith.constant dense<0xFF800000> : vector<8xf32>
    %61 = vector.multi_reduction <maximumf>, %60, %cst_38 [1] : vector<8x8xf32> to vector<8xf32>
    %62 = vector.shape_cast %61 : vector<8xf32> to vector<8x1xf32>
    %63 = vector.broadcast %62 : vector<8x1xf32> to vector<8x8xf32>
    %64 = arith.subf %60, %63 : vector<8x8xf32>
    %65 = math.exp %64 : vector<8x8xf32>
    %cst_39 = arith.constant dense<0.000000e+00> : vector<8xf32>
    %66 = vector.multi_reduction <add>, %65, %cst_39 [1] : vector<8x8xf32> to vector<8xf32>
    %67 = vector.shape_cast %66 : vector<8xf32> to vector<8x1xf32>
    %68 = vector.broadcast %67 : vector<8x1xf32> to vector<8x8xf32>
    %69 = arith.divf %65, %68 : vector<8x8xf32>
    %cst_40 = arith.constant dense<0.000000e+00> : vector<8x8xf32>
    %70 = tpu.matmul %69, %55, %cst_40 {dimension_numbers = #tpu.dot_dimension_numbers<[1], [0], [0], [1], [0, 0, 1, 1], [], []>} : vector<8x8xf32>, vector<8x8xf32>, vector<8x8xf32> -> vector<8x8xf32>
    %c0_41 = arith.constant 0 : index
    %c0_42 = arith.constant 0 : index
    %c16_43 = arith.constant 16 : index
    %71 = vector.load %arg3[%c0_41, %c0_42, %c16_43] : memref<1x8x32xf32, #tpu.memory_space<vmem>>, vector<1x8x8xf32>
    %72 = vector.shape_cast %71 : vector<1x8x8xf32> to vector<8x8xf32>
    %73 = vector.shape_cast %70 : vector<8x8xf32> to vector<1x8x8xf32>
    tpu.vector_store %arg3[%c0_41, %c0_42, %c16_43], %73 {strides = array<i32>} : memref<1x8x32xf32, #tpu.memory_space<vmem>>, vector<1x8x8xf32>,
    %c0_44 = arith.constant 0 : index
    %c0_45 = arith.constant 0 : index
    %c24 = arith.constant 24 : index
    %74 = vector.load %arg1[%c0_44, %c0_45, %c24] : memref<1x8x96xf32, #tpu.memory_space<vmem>>, vector<1x8x8xf32>
    %75 = vector.shape_cast %74 : vector<1x8x8xf32> to vector<8x8xf32>
    %c0_46 = arith.constant 0 : index
    %c0_47 = arith.constant 0 : index
    %c56 = arith.constant 56 : index
    %76 = vector.load %arg1[%c0_46, %c0_47, %c56] : memref<1x8x96xf32, #tpu.memory_space<vmem>>, vector<1x8x8xf32>
    %77 = vector.shape_cast %76 : vector<1x8x8xf32> to vector<8x8xf32>
    %c0_48 = arith.constant 0 : index
    %c0_49 = arith.constant 0 : index
    %c88 = arith.constant 88 : index
    %78 = vector.load %arg1[%c0_48, %c0_49, %c88] : memref<1x8x96xf32, #tpu.memory_space<vmem>>, vector<1x8x8xf32>
    %79 = vector.shape_cast %78 : vector<1x8x8xf32> to vector<8x8xf32>
    %cst_50 = arith.constant dense<0.000000e+00> : vector<8x8xf32>
    %80 = tpu.matmul %75, %77, %cst_50 {dimension_numbers = #tpu.dot_dimension_numbers<[1], [1], [0], [0], [0, 0, 1, 0], [], []>} : vector<8x8xf32>, vector<8x8xf32>, vector<8x8xf32> -> vector<8x8xf32>
    %cst_51 = arith.constant 0.353553385 : f32
    %81 = vector.broadcast %cst_51 : f32 to vector<8x8xf32>
    %82 = arith.mulf %80, %81 : vector<8x8xf32>
    %83 = vector.broadcast %1 : vector<1x8xf32> to vector<8x8xf32>
    %84 = arith.addf %82, %83 : vector<8x8xf32>
    %cst_52 = arith.constant dense<0xFF800000> : vector<8xf32>
    %85 = vector.multi_reduction <maximumf>, %84, %cst_52 [1] : vector<8x8xf32> to vector<8xf32>
    %86 = vector.shape_cast %85 : vector<8xf32> to vector<8x1xf32>
    %87 = vector.broadcast %86 : vector<8x1xf32> to vector<8x8xf32>
    %88 = arith.subf %84, %87 : vector<8x8xf32>
    %89 = math.exp %88 : vector<8x8xf32>
    %cst_53 = arith.constant dense<0.000000e+00> : vector<8xf32>
    %90 = vector.multi_reduction <add>, %89, %cst_53 [1] : vector<8x8xf32> to vector<8xf32>
    %91 = vector.shape_cast %90 : vector<8xf32> to vector<8x1xf32>
    %92 = vector.broadcast %91 : vector<8x1xf32> to vector<8x8xf32>
    %93 = arith.divf %89, %92 : vector<8x8xf32>
    %cst_54 = arith.constant dense<0.000000e+00> : vector<8x8xf32>
    %94 = tpu.matmul %93, %79, %cst_54 {dimension_numbers = #tpu.dot_dimension_numbers<[1], [0], [0], [1], [0, 0, 1, 1], [], []>} : vector<8x8xf32>, vector<8x8xf32>, vector<8x8xf32> -> vector<8x8xf32>
    %c0_55 = arith.constant 0 : index
    %c0_56 = arith.constant 0 : index
    %c24_57 = arith.constant 24 : index
    %95 = vector.load %arg3[%c0_55, %c0_56, %c24_57] : memref<1x8x32xf32, #tpu.memory_space<vmem>>, vector<1x8x8xf32>
    %96 = vector.shape_cast %95 : vector<1x8x8xf32> to vector<8x8xf32>
    %97 = vector.shape_cast %94 : vector<8x8xf32> to vector<1x8x8xf32>
    tpu.vector_store %arg3[%c0_55, %c0_56, %c24_57], %97 {strides = array<i32>} : memref<1x8x32xf32, #tpu.memory_space<vmem>>, vector<1x8x8xf32>,
    return
  }
  func.func @transform_0(%arg0: i32) -> (i32, i32, i32) {
    %c0_i32 = arith.constant 0 : i32
    %c0_i32_0 = arith.constant 0 : i32
    %c0_i32_1 = arith.constant 0 : i32
    return %arg0, %c0_i32, %c0_i32_0 : i32, i32, i32
  }
  func.func @transform_1(%arg0: i32) -> (i32, i32, i32) {
    %c0_i32 = arith.constant 0 : i32
    %c0_i32_0 = arith.constant 0 : i32
    %c0_i32_1 = arith.constant 0 : i32
    return %arg0, %c0_i32, %c0_i32_0 : i32, i32, i32
  }
  func.func @transform_2(%arg0: i32) -> (i32, i32, i32) {
    %c0_i32 = arith.constant 0 : i32
    %c0_i32_0 = arith.constant 0 : i32
    %c0_i32_1 = arith.constant 0 : i32
    return %arg0, %c0_i32, %c0_i32_0 : i32, i32, i32
  }
}

module attributes {stable_mosaic.version = 11 : i64} {
  func.func @_matmul_bias_kernel(%arg0: i32, %arg1: i32, %arg2: i32, %arg3: memref<16x32xf32, #tpu.memory_space<vmem>>, %arg4: memref<32x96xf32, #tpu.memory_space<vmem>>, %arg5: memref<1x96xf32, #tpu.memory_space<vmem>>, %arg6: memref<16x96xf32, #tpu.memory_space<vmem>>, %arg7: memref<16x96xf32, #tpu.memory_space<vmem>>) attributes {dimension_semantics = [#tpu.dimension_semantics<parallel>, #tpu.dimension_semantics<parallel>, #tpu.dimension_semantics<arbitrary>], iteration_bounds = array<i64: 1, 1, 1>, scalar_prefetch = 0 : i64, scratch_operands = 1 : i64, tpu.core_type = #tpu.core_type<tc>, window_params = [{transform_indices = @transform_0, window_bounds = array<i64: 16, 32>}, {transform_indices = @transform_1, window_bounds = array<i64: 32, 96>}, {transform_indices = @transform_2, window_bounds = array<i64: 1, 96>}, {transform_indices = @transform_3, window_bounds = array<i64: 16, 96>}]} {
    %c0_i32 = arith.constant 0 : i32
    %0 = arith.cmpi eq, %arg2, %c0_i32 : i32
    %1 = arith.extui %0 : i1 to i32
    %c0_i32_0 = arith.constant 0 : i32
    %2 = arith.cmpi ne, %1, %c0_i32_0 : i32
    scf.if %2 {
      %cst_10 = arith.constant 0.000000e+00 : f32
      %12 = vector.broadcast %cst_10 : f32 to vector<16x96xf32>
      %c0_11 = arith.constant 0 : index
      %c0_12 = arith.constant 0 : index
      %13 = vector.load %arg7[%c0_11, %c0_12] : memref<16x96xf32, #tpu.memory_space<vmem>>, vector<16x96xf32>
      tpu.vector_store %arg7[%c0_11, %c0_12], %12 {strides = array<i32>} : memref<16x96xf32, #tpu.memory_space<vmem>>, vector<16x96xf32>,
    } else {
    }
    %c0 = arith.constant 0 : index
    %c0_1 = arith.constant 0 : index
    %3 = vector.load %arg7[%c0, %c0_1] : memref<16x96xf32, #tpu.memory_space<vmem>>, vector<16x96xf32>
    %c0_2 = arith.constant 0 : index
    %c0_3 = arith.constant 0 : index
    %4 = vector.load %arg3[%c0_2, %c0_3] : memref<16x32xf32, #tpu.memory_space<vmem>>, vector<16x32xf32>
    %c0_4 = arith.constant 0 : index
    %c0_5 = arith.constant 0 : index
    %5 = vector.load %arg4[%c0_4, %c0_5] : memref<32x96xf32, #tpu.memory_space<vmem>>, vector<32x96xf32>
    %cst = arith.constant dense<0.000000e+00> : vector<16x96xf32>
    %6 = tpu.matmul %4, %5, %cst {dimension_numbers = #tpu.dot_dimension_numbers<[1], [0], [0], [1], [0, 0, 1, 1], [], []>} : vector<16x32xf32>, vector<32x96xf32>, vector<16x96xf32> -> vector<16x96xf32>
    %7 = arith.addf %3, %6 : vector<16x96xf32>
    %c0_6 = arith.constant 0 : index
    %c0_7 = arith.constant 0 : index
    %8 = vector.load %arg7[%c0_6, %c0_7] : memref<16x96xf32, #tpu.memory_space<vmem>>, vector<16x96xf32>
    tpu.vector_store %arg7[%c0_6, %c0_7], %7 {strides = array<i32>} : memref<16x96xf32, #tpu.memory_space<vmem>>, vector<16x96xf32>,
    %c0_i32_8 = arith.constant 0 : i32
    %9 = arith.cmpi eq, %arg2, %c0_i32_8 : i32
    %10 = arith.extui %9 : i1 to i32
    %c0_i32_9 = arith.constant 0 : i32
    %11 = arith.cmpi ne, %10, %c0_i32_9 : i32
    scf.if %11 {
      %c0_10 = arith.constant 0 : index
      %c0_11 = arith.constant 0 : index
      %12 = vector.load %arg7[%c0_10, %c0_11] : memref<16x96xf32, #tpu.memory_space<vmem>>, vector<16x96xf32>
      %c0_12 = arith.constant 0 : index
      %c0_13 = arith.constant 0 : index
      %13 = vector.load %arg5[%c0_12, %c0_13] : memref<1x96xf32, #tpu.memory_space<vmem>>, vector<1x96xf32>
      %14 = vector.broadcast %13 : vector<1x96xf32> to vector<16x96xf32>
      %15 = arith.addf %12, %14 : vector<16x96xf32>
      %c0_14 = arith.constant 0 : index
      %c0_15 = arith.constant 0 : index
      %16 = vector.load %arg6[%c0_14, %c0_15] : memref<16x96xf32, #tpu.memory_space<vmem>>, vector<16x96xf32>
      tpu.vector_store %arg6[%c0_14, %c0_15], %15 {strides = array<i32>} : memref<16x96xf32, #tpu.memory_space<vmem>>, vector<16x96xf32>,
    } else {
    }
    return
  }
  func.func @transform_0(%arg0: i32, %arg1: i32, %arg2: i32) -> (i32, i32) {
    %c0_i32 = arith.constant 0 : i32
    return %arg0, %arg2 : i32, i32
  }
  func.func @transform_1(%arg0: i32, %arg1: i32, %arg2: i32) -> (i32, i32) {
    %c0_i32 = arith.constant 0 : i32
    return %arg2, %arg1 : i32, i32
  }
  func.func @transform_2(%arg0: i32, %arg1: i32, %arg2: i32) -> (i32, i32) {
    %c0_i32 = arith.constant 0 : i32
    %c0_i32_0 = arith.constant 0 : i32
    return %c0_i32, %arg1 : i32, i32
  }
  func.func @transform_3(%arg0: i32, %arg1: i32, %arg2: i32) -> (i32, i32) {
    %c0_i32 = arith.constant 0 : i32
    return %arg0, %arg1 : i32, i32
  }
}

module attributes {stable_mosaic.version = 11 : i64} {
  func.func @_matmul_bias_res_ln_kernel(%arg0: i32, %arg1: i32, %arg2: memref<16x16xf32, #tpu.memory_space<vmem>>, %arg3: memref<16x32xf32, #tpu.memory_space<vmem>>, %arg4: memref<1x32xf32, #tpu.memory_space<vmem>>, %arg5: memref<16x32xf32, #tpu.memory_space<vmem>>, %arg6: memref<1x32xf32, #tpu.memory_space<vmem>>, %arg7: memref<1x32xf32, #tpu.memory_space<vmem>>, %arg8: memref<16x32xf32, #tpu.memory_space<vmem>>, %arg9: memref<16x32xf32, #tpu.memory_space<vmem>>) attributes {dimension_semantics = [#tpu.dimension_semantics<parallel>, #tpu.dimension_semantics<arbitrary>], iteration_bounds = array<i64: 1, 1>, scalar_prefetch = 0 : i64, scratch_operands = 1 : i64, tpu.core_type = #tpu.core_type<tc>, window_params = [{transform_indices = @transform_0, window_bounds = array<i64: 16, 16>}, {transform_indices = @transform_1, window_bounds = array<i64: 16, 32>}, {pipeline_mode = #tpu.pipeline_mode<synchronous>, transform_indices = @transform_2, window_bounds = array<i64: 1, 32>}, {transform_indices = @transform_3, window_bounds = array<i64: 16, 32>}, {pipeline_mode = #tpu.pipeline_mode<synchronous>, transform_indices = @transform_4, window_bounds = array<i64: 1, 32>}, {pipeline_mode = #tpu.pipeline_mode<synchronous>, transform_indices = @transform_5, window_bounds = array<i64: 1, 32>}, {transform_indices = @transform_6, window_bounds = array<i64: 16, 32>}]} {
    %c0_i32 = arith.constant 0 : i32
    %0 = arith.cmpi eq, %arg1, %c0_i32 : i32
    %1 = arith.extui %0 : i1 to i32
    %c0_i32_0 = arith.constant 0 : i32
    %2 = arith.cmpi ne, %1, %c0_i32_0 : i32
    scf.if %2 {
      %cst_10 = arith.constant 0.000000e+00 : f32
      %12 = vector.broadcast %cst_10 : f32 to vector<16x32xf32>
      %c0_11 = arith.constant 0 : index
      %c0_12 = arith.constant 0 : index
      %13 = vector.load %arg9[%c0_11, %c0_12] : memref<16x32xf32, #tpu.memory_space<vmem>>, vector<16x32xf32>
      tpu.vector_store %arg9[%c0_11, %c0_12], %12 {strides = array<i32>} : memref<16x32xf32, #tpu.memory_space<vmem>>, vector<16x32xf32>,
    } else {
    }
    %c0 = arith.constant 0 : index
    %c0_1 = arith.constant 0 : index
    %3 = vector.load %arg9[%c0, %c0_1] : memref<16x32xf32, #tpu.memory_space<vmem>>, vector<16x32xf32>
    %c0_2 = arith.constant 0 : index
    %c0_3 = arith.constant 0 : index
    %4 = vector.load %arg2[%c0_2, %c0_3] : memref<16x16xf32, #tpu.memory_space<vmem>>, vector<16x16xf32>
    %c0_4 = arith.constant 0 : index
    %c0_5 = arith.constant 0 : index
    %5 = vector.load %arg3[%c0_4, %c0_5] : memref<16x32xf32, #tpu.memory_space<vmem>>, vector<16x32xf32>
    %cst = arith.constant dense<0.000000e+00> : vector<16x32xf32>
    %6 = tpu.matmul %4, %5, %cst {dimension_numbers = #tpu.dot_dimension_numbers<[1], [0], [0], [1], [0, 0, 1, 1], [], []>} : vector<16x16xf32>, vector<16x32xf32>, vector<16x32xf32> -> vector<16x32xf32>
    %7 = arith.addf %3, %6 : vector<16x32xf32>
    %c0_6 = arith.constant 0 : index
    %c0_7 = arith.constant 0 : index
    %8 = vector.load %arg9[%c0_6, %c0_7] : memref<16x32xf32, #tpu.memory_space<vmem>>, vector<16x32xf32>
    tpu.vector_store %arg9[%c0_6, %c0_7], %7 {strides = array<i32>} : memref<16x32xf32, #tpu.memory_space<vmem>>, vector<16x32xf32>,
    %c0_i32_8 = arith.constant 0 : i32
    %9 = arith.cmpi eq, %arg1, %c0_i32_8 : i32
    %10 = arith.extui %9 : i1 to i32
    %c0_i32_9 = arith.constant 0 : i32
    %11 = arith.cmpi ne, %10, %c0_i32_9 : i32
    scf.if %11 {
      %c0_10 = arith.constant 0 : index
      %c0_11 = arith.constant 0 : index
      %12 = vector.load %arg9[%c0_10, %c0_11] : memref<16x32xf32, #tpu.memory_space<vmem>>, vector<16x32xf32>
      %c0_12 = arith.constant 0 : index
      %c0_13 = arith.constant 0 : index
      %13 = vector.load %arg4[%c0_12, %c0_13] : memref<1x32xf32, #tpu.memory_space<vmem>>, vector<1x32xf32>
      %14 = vector.broadcast %13 : vector<1x32xf32> to vector<16x32xf32>
      %15 = arith.addf %12, %14 : vector<16x32xf32>
      %c0_14 = arith.constant 0 : index
      %c0_15 = arith.constant 0 : index
      %16 = vector.load %arg5[%c0_14, %c0_15] : memref<16x32xf32, #tpu.memory_space<vmem>>, vector<16x32xf32>
      %17 = arith.addf %15, %16 : vector<16x32xf32>
      %cst_16 = arith.constant dense<0.000000e+00> : vector<16xf32>
      %18 = vector.multi_reduction <add>, %17, %cst_16 [1] : vector<16x32xf32> to vector<16xf32>
      %19 = vector.shape_cast %18 : vector<16xf32> to vector<16x1xf32>
      %cst_17 = arith.constant 3.200000e+01 : f32
      %20 = vector.broadcast %cst_17 : f32 to vector<16x1xf32>
      %21 = arith.divf %19, %20 : vector<16x1xf32>
      %22 = vector.broadcast %21 : vector<16x1xf32> to vector<16x32xf32>
      %23 = arith.subf %17, %22 : vector<16x32xf32>
      %24 = arith.mulf %23, %23 : vector<16x32xf32>
      %cst_18 = arith.constant dense<0.000000e+00> : vector<16xf32>
      %25 = vector.multi_reduction <add>, %24, %cst_18 [1] : vector<16x32xf32> to vector<16xf32>
      %26 = vector.shape_cast %25 : vector<16xf32> to vector<16x1xf32>
      %cst_19 = arith.constant 3.200000e+01 : f32
      %27 = vector.broadcast %cst_19 : f32 to vector<16x1xf32>
      %28 = arith.divf %26, %27 : vector<16x1xf32>
      %29 = vector.broadcast %21 : vector<16x1xf32> to vector<16x32xf32>
      %30 = arith.subf %17, %29 : vector<16x32xf32>
      %cst_20 = arith.constant 9.99999996E-13 : f32
      %31 = vector.broadcast %cst_20 : f32 to vector<16x1xf32>
      %32 = arith.addf %28, %31 : vector<16x1xf32>
      %33 = math.sqrt %32 : vector<16x1xf32>
      %34 = vector.broadcast %33 : vector<16x1xf32> to vector<16x32xf32>
      %35 = arith.divf %30, %34 : vector<16x32xf32>
      %c0_21 = arith.constant 0 : index
      %c0_22 = arith.constant 0 : index
      %36 = vector.load %arg6[%c0_21, %c0_22] : memref<1x32xf32, #tpu.memory_space<vmem>>, vector<1x32xf32>
      %37 = vector.broadcast %36 : vector<1x32xf32> to vector<16x32xf32>
      %38 = arith.mulf %37, %35 : vector<16x32xf32>
      %c0_23 = arith.constant 0 : index
      %c0_24 = arith.constant 0 : index
      %39 = vector.load %arg7[%c0_23, %c0_24] : memref<1x32xf32, #tpu.memory_space<vmem>>, vector<1x32xf32>
      %40 = vector.broadcast %39 : vector<1x32xf32> to vector<16x32xf32>
      %41 = arith.addf %38, %40 : vector<16x32xf32>
      %c0_25 = arith.constant 0 : index
      %c0_26 = arith.constant 0 : index
      %42 = vector.load %arg8[%c0_25, %c0_26] : memref<16x32xf32, #tpu.memory_space<vmem>>, vector<16x32xf32>
      tpu.vector_store %arg8[%c0_25, %c0_26], %41 {strides = array<i32>} : memref<16x32xf32, #tpu.memory_space<vmem>>, vector<16x32xf32>,
    } else {
    }
    return
  }
  func.func @transform_0(%arg0: i32, %arg1: i32) -> (i32, i32) {
    %c0_i32 = arith.constant 0 : i32
    return %arg0, %arg1 : i32, i32
  }
  func.func @transform_1(%arg0: i32, %arg1: i32) -> (i32, i32) {
    %c0_i32 = arith.constant 0 : i32
    %c0_i32_0 = arith.constant 0 : i32
    return %arg1, %c0_i32 : i32, i32
  }
  func.func @transform_2(%arg0: i32, %arg1: i32) -> (i32, i32) {
    %c0_i32 = arith.constant 0 : i32
    %c0_i32_0 = arith.constant 0 : i32
    %c0_i32_1 = arith.constant 0 : i32
    return %c0_i32, %c0_i32_0 : i32, i32
  }
  func.func @transform_3(%arg0: i32, %arg1: i32) -> (i32, i32) {
    %c0_i32 = arith.constant 0 : i32
    %c0_i32_0 = arith.constant 0 : i32
    return %arg0, %c0_i32 : i32, i32
  }
  func.func @transform_4(%arg0: i32, %arg1: i32) -> (i32, i32) {
    %c0_i32 = arith.constant 0 : i32
    %c0_i32_0 = arith.constant 0 : i32
    %c0_i32_1 = arith.constant 0 : i32
    return %c0_i32, %c0_i32_0 : i32, i32
  }
  func.func @transform_5(%arg0: i32, %arg1: i32) -> (i32, i32) {
    %c0_i32 = arith.constant 0 : i32
    %c0_i32_0 = arith.constant 0 : i32
    %c0_i32_1 = arith.constant 0 : i32
    return %c0_i32, %c0_i32_0 : i32, i32
  }
  func.func @transform_6(%arg0: i32, %arg1: i32) -> (i32, i32) {
    %c0_i32 = arith.constant 0 : i32
    %c0_i32_0 = arith.constant 0 : i32
    return %arg0, %c0_i32 : i32, i32
  }
}

module attributes {stable_mosaic.version = 11 : i64} {
  func.func @_matmul_bias_res_ln_kernel(%arg0: i32, %arg1: i32, %arg2: memref<16x32xf32, #tpu.memory_space<vmem>>, %arg3: memref<32x32xf32, #tpu.memory_space<vmem>>, %arg4: memref<1x32xf32, #tpu.memory_space<vmem>>, %arg5: memref<16x32xf32, #tpu.memory_space<vmem>>, %arg6: memref<1x32xf32, #tpu.memory_space<vmem>>, %arg7: memref<1x32xf32, #tpu.memory_space<vmem>>, %arg8: memref<16x32xf32, #tpu.memory_space<vmem>>, %arg9: memref<16x32xf32, #tpu.memory_space<vmem>>) attributes {dimension_semantics = [#tpu.dimension_semantics<parallel>, #tpu.dimension_semantics<arbitrary>], iteration_bounds = array<i64: 1, 1>, scalar_prefetch = 0 : i64, scratch_operands = 1 : i64, tpu.core_type = #tpu.core_type<tc>, window_params = [{transform_indices = @transform_0, window_bounds = array<i64: 16, 32>}, {transform_indices = @transform_1, window_bounds = array<i64: 32, 32>}, {pipeline_mode = #tpu.pipeline_mode<synchronous>, transform_indices = @transform_2, window_bounds = array<i64: 1, 32>}, {transform_indices = @transform_3, window_bounds = array<i64: 16, 32>}, {pipeline_mode = #tpu.pipeline_mode<synchronous>, transform_indices = @transform_4, window_bounds = array<i64: 1, 32>}, {pipeline_mode = #tpu.pipeline_mode<synchronous>, transform_indices = @transform_5, window_bounds = array<i64: 1, 32>}, {transform_indices = @transform_6, window_bounds = array<i64: 16, 32>}]} {
    %c0_i32 = arith.constant 0 : i32
    %0 = arith.cmpi eq, %arg1, %c0_i32 : i32
    %1 = arith.extui %0 : i1 to i32
    %c0_i32_0 = arith.constant 0 : i32
    %2 = arith.cmpi ne, %1, %c0_i32_0 : i32
    scf.if %2 {
      %cst_10 = arith.constant 0.000000e+00 : f32
      %12 = vector.broadcast %cst_10 : f32 to vector<16x32xf32>
      %c0_11 = arith.constant 0 : index
      %c0_12 = arith.constant 0 : index
      %13 = vector.load %arg9[%c0_11, %c0_12] : memref<16x32xf32, #tpu.memory_space<vmem>>, vector<16x32xf32>
      tpu.vector_store %arg9[%c0_11, %c0_12], %12 {strides = array<i32>} : memref<16x32xf32, #tpu.memory_space<vmem>>, vector<16x32xf32>,
    } else {
    }
    %c0 = arith.constant 0 : index
    %c0_1 = arith.constant 0 : index
    %3 = vector.load %arg9[%c0, %c0_1] : memref<16x32xf32, #tpu.memory_space<vmem>>, vector<16x32xf32>
    %c0_2 = arith.constant 0 : index
    %c0_3 = arith.constant 0 : index
    %4 = vector.load %arg2[%c0_2, %c0_3] : memref<16x32xf32, #tpu.memory_space<vmem>>, vector<16x32xf32>
    %c0_4 = arith.constant 0 : index
    %c0_5 = arith.constant 0 : index
    %5 = vector.load %arg3[%c0_4, %c0_5] : memref<32x32xf32, #tpu.memory_space<vmem>>, vector<32x32xf32>
    %cst = arith.constant dense<0.000000e+00> : vector<16x32xf32>
    %6 = tpu.matmul %4, %5, %cst {dimension_numbers = #tpu.dot_dimension_numbers<[1], [0], [0], [1], [0, 0, 1, 1], [], []>} : vector<16x32xf32>, vector<32x32xf32>, vector<16x32xf32> -> vector<16x32xf32>
    %7 = arith.addf %3, %6 : vector<16x32xf32>
    %c0_6 = arith.constant 0 : index
    %c0_7 = arith.constant 0 : index
    %8 = vector.load %arg9[%c0_6, %c0_7] : memref<16x32xf32, #tpu.memory_space<vmem>>, vector<16x32xf32>
    tpu.vector_store %arg9[%c0_6, %c0_7], %7 {strides = array<i32>} : memref<16x32xf32, #tpu.memory_space<vmem>>, vector<16x32xf32>,
    %c0_i32_8 = arith.constant 0 : i32
    %9 = arith.cmpi eq, %arg1, %c0_i32_8 : i32
    %10 = arith.extui %9 : i1 to i32
    %c0_i32_9 = arith.constant 0 : i32
    %11 = arith.cmpi ne, %10, %c0_i32_9 : i32
    scf.if %11 {
      %c0_10 = arith.constant 0 : index
      %c0_11 = arith.constant 0 : index
      %12 = vector.load %arg9[%c0_10, %c0_11] : memref<16x32xf32, #tpu.memory_space<vmem>>, vector<16x32xf32>
      %c0_12 = arith.constant 0 : index
      %c0_13 = arith.constant 0 : index
      %13 = vector.load %arg4[%c0_12, %c0_13] : memref<1x32xf32, #tpu.memory_space<vmem>>, vector<1x32xf32>
      %14 = vector.broadcast %13 : vector<1x32xf32> to vector<16x32xf32>
      %15 = arith.addf %12, %14 : vector<16x32xf32>
      %c0_14 = arith.constant 0 : index
      %c0_15 = arith.constant 0 : index
      %16 = vector.load %arg5[%c0_14, %c0_15] : memref<16x32xf32, #tpu.memory_space<vmem>>, vector<16x32xf32>
      %17 = arith.addf %15, %16 : vector<16x32xf32>
      %cst_16 = arith.constant dense<0.000000e+00> : vector<16xf32>
      %18 = vector.multi_reduction <add>, %17, %cst_16 [1] : vector<16x32xf32> to vector<16xf32>
      %19 = vector.shape_cast %18 : vector<16xf32> to vector<16x1xf32>
      %cst_17 = arith.constant 3.200000e+01 : f32
      %20 = vector.broadcast %cst_17 : f32 to vector<16x1xf32>
      %21 = arith.divf %19, %20 : vector<16x1xf32>
      %22 = vector.broadcast %21 : vector<16x1xf32> to vector<16x32xf32>
      %23 = arith.subf %17, %22 : vector<16x32xf32>
      %24 = arith.mulf %23, %23 : vector<16x32xf32>
      %cst_18 = arith.constant dense<0.000000e+00> : vector<16xf32>
      %25 = vector.multi_reduction <add>, %24, %cst_18 [1] : vector<16x32xf32> to vector<16xf32>
      %26 = vector.shape_cast %25 : vector<16xf32> to vector<16x1xf32>
      %cst_19 = arith.constant 3.200000e+01 : f32
      %27 = vector.broadcast %cst_19 : f32 to vector<16x1xf32>
      %28 = arith.divf %26, %27 : vector<16x1xf32>
      %29 = vector.broadcast %21 : vector<16x1xf32> to vector<16x32xf32>
      %30 = arith.subf %17, %29 : vector<16x32xf32>
      %cst_20 = arith.constant 9.99999996E-13 : f32
      %31 = vector.broadcast %cst_20 : f32 to vector<16x1xf32>
      %32 = arith.addf %28, %31 : vector<16x1xf32>
      %33 = math.sqrt %32 : vector<16x1xf32>
      %34 = vector.broadcast %33 : vector<16x1xf32> to vector<16x32xf32>
      %35 = arith.divf %30, %34 : vector<16x32xf32>
      %c0_21 = arith.constant 0 : index
      %c0_22 = arith.constant 0 : index
      %36 = vector.load %arg6[%c0_21, %c0_22] : memref<1x32xf32, #tpu.memory_space<vmem>>, vector<1x32xf32>
      %37 = vector.broadcast %36 : vector<1x32xf32> to vector<16x32xf32>
      %38 = arith.mulf %37, %35 : vector<16x32xf32>
      %c0_23 = arith.constant 0 : index
      %c0_24 = arith.constant 0 : index
      %39 = vector.load %arg7[%c0_23, %c0_24] : memref<1x32xf32, #tpu.memory_space<vmem>>, vector<1x32xf32>
      %40 = vector.broadcast %39 : vector<1x32xf32> to vector<16x32xf32>
      %41 = arith.addf %38, %40 : vector<16x32xf32>
      %c0_25 = arith.constant 0 : index
      %c0_26 = arith.constant 0 : index
      %42 = vector.load %arg8[%c0_25, %c0_26] : memref<16x32xf32, #tpu.memory_space<vmem>>, vector<16x32xf32>
      tpu.vector_store %arg8[%c0_25, %c0_26], %41 {strides = array<i32>} : memref<16x32xf32, #tpu.memory_space<vmem>>, vector<16x32xf32>,
    } else {
    }
    return
  }
  func.func @transform_0(%arg0: i32, %arg1: i32) -> (i32, i32) {
    %c0_i32 = arith.constant 0 : i32
    return %arg0, %arg1 : i32, i32
  }
  func.func @transform_1(%arg0: i32, %arg1: i32) -> (i32, i32) {
    %c0_i32 = arith.constant 0 : i32
    %c0_i32_0 = arith.constant 0 : i32
    return %arg1, %c0_i32 : i32, i32
  }
  func.func @transform_2(%arg0: i32, %arg1: i32) -> (i32, i32) {
    %c0_i32 = arith.constant 0 : i32
    %c0_i32_0 = arith.constant 0 : i32
    %c0_i32_1 = arith.constant 0 : i32
    return %c0_i32, %c0_i32_0 : i32, i32
  }
  func.func @transform_3(%arg0: i32, %arg1: i32) -> (i32, i32) {
    %c0_i32 = arith.constant 0 : i32
    %c0_i32_0 = arith.constant 0 : i32
    return %arg0, %c0_i32 : i32, i32
  }
  func.func @transform_4(%arg0: i32, %arg1: i32) -> (i32, i32) {
    %c0_i32 = arith.constant 0 : i32
    %c0_i32_0 = arith.constant 0 : i32
    %c0_i32_1 = arith.constant 0 : i32
    return %c0_i32, %c0_i32_0 : i32, i32
  }
  func.func @transform_5(%arg0: i32, %arg1: i32) -> (i32, i32) {
    %c0_i32 = arith.constant 0 : i32
    %c0_i32_0 = arith.constant 0 : i32
    %c0_i32_1 = arith.constant 0 : i32
    return %c0_i32, %c0_i32_0 : i32, i32
  }
  func.func @transform_6(%arg0: i32, %arg1: i32) -> (i32, i32) {
    %c0_i32 = arith.constant 0 : i32
    %c0_i32_0 = arith.constant 0 : i32
    return %arg0, %c0_i32 : i32, i32
  }
}

module attributes {stable_mosaic.version = 11 : i64} {
  func.func @_matmul_bias_kernel(%arg0: i32, %arg1: i32, %arg2: i32, %arg3: memref<16x32xf32, #tpu.memory_space<vmem>>, %arg4: memref<32x64xf32, #tpu.memory_space<vmem>>, %arg5: memref<1x64xf32, #tpu.memory_space<vmem>>, %arg6: memref<16x64xf32, #tpu.memory_space<vmem>>, %arg7: memref<16x64xf32, #tpu.memory_space<vmem>>) attributes {dimension_semantics = [#tpu.dimension_semantics<parallel>, #tpu.dimension_semantics<parallel>, #tpu.dimension_semantics<arbitrary>], iteration_bounds = array<i64: 1, 1, 1>, scalar_prefetch = 0 : i64, scratch_operands = 1 : i64, tpu.core_type = #tpu.core_type<tc>, window_params = [{transform_indices = @transform_0, window_bounds = array<i64: 16, 32>}, {transform_indices = @transform_1, window_bounds = array<i64: 32, 64>}, {transform_indices = @transform_2, window_bounds = array<i64: 1, 64>}, {transform_indices = @transform_3, window_bounds = array<i64: 16, 64>}]} {
    %c0_i32 = arith.constant 0 : i32
    %0 = arith.cmpi eq, %arg2, %c0_i32 : i32
    %1 = arith.extui %0 : i1 to i32
    %c0_i32_0 = arith.constant 0 : i32
    %2 = arith.cmpi ne, %1, %c0_i32_0 : i32
    scf.if %2 {
      %cst_10 = arith.constant 0.000000e+00 : f32
      %12 = vector.broadcast %cst_10 : f32 to vector<16x64xf32>
      %c0_11 = arith.constant 0 : index
      %c0_12 = arith.constant 0 : index
      %13 = vector.load %arg7[%c0_11, %c0_12] : memref<16x64xf32, #tpu.memory_space<vmem>>, vector<16x64xf32>
      tpu.vector_store %arg7[%c0_11, %c0_12], %12 {strides = array<i32>} : memref<16x64xf32, #tpu.memory_space<vmem>>, vector<16x64xf32>,
    } else {
    }
    %c0 = arith.constant 0 : index
    %c0_1 = arith.constant 0 : index
    %3 = vector.load %arg7[%c0, %c0_1] : memref<16x64xf32, #tpu.memory_space<vmem>>, vector<16x64xf32>
    %c0_2 = arith.constant 0 : index
    %c0_3 = arith.constant 0 : index
    %4 = vector.load %arg3[%c0_2, %c0_3] : memref<16x32xf32, #tpu.memory_space<vmem>>, vector<16x32xf32>
    %c0_4 = arith.constant 0 : index
    %c0_5 = arith.constant 0 : index
    %5 = vector.load %arg4[%c0_4, %c0_5] : memref<32x64xf32, #tpu.memory_space<vmem>>, vector<32x64xf32>
    %cst = arith.constant dense<0.000000e+00> : vector<16x64xf32>
    %6 = tpu.matmul %4, %5, %cst {dimension_numbers = #tpu.dot_dimension_numbers<[1], [0], [0], [1], [0, 0, 1, 1], [], []>} : vector<16x32xf32>, vector<32x64xf32>, vector<16x64xf32> -> vector<16x64xf32>
    %7 = arith.addf %3, %6 : vector<16x64xf32>
    %c0_6 = arith.constant 0 : index
    %c0_7 = arith.constant 0 : index
    %8 = vector.load %arg7[%c0_6, %c0_7] : memref<16x64xf32, #tpu.memory_space<vmem>>, vector<16x64xf32>
    tpu.vector_store %arg7[%c0_6, %c0_7], %7 {strides = array<i32>} : memref<16x64xf32, #tpu.memory_space<vmem>>, vector<16x64xf32>,
    %c0_i32_8 = arith.constant 0 : i32
    %9 = arith.cmpi eq, %arg2, %c0_i32_8 : i32
    %10 = arith.extui %9 : i1 to i32
    %c0_i32_9 = arith.constant 0 : i32
    %11 = arith.cmpi ne, %10, %c0_i32_9 : i32
    scf.if %11 {
      %c0_10 = arith.constant 0 : index
      %c0_11 = arith.constant 0 : index
      %12 = vector.load %arg7[%c0_10, %c0_11] : memref<16x64xf32, #tpu.memory_space<vmem>>, vector<16x64xf32>
      %c0_12 = arith.constant 0 : index
      %c0_13 = arith.constant 0 : index
      %13 = vector.load %arg5[%c0_12, %c0_13] : memref<1x64xf32, #tpu.memory_space<vmem>>, vector<1x64xf32>
      %14 = vector.broadcast %13 : vector<1x64xf32> to vector<16x64xf32>
      %15 = arith.addf %12, %14 : vector<16x64xf32>
      %cst_14 = arith.constant 5.000000e-01 : f32
      %16 = vector.broadcast %cst_14 : f32 to vector<16x64xf32>
      %17 = arith.mulf %15, %16 : vector<16x64xf32>
      %cst_15 = arith.constant 1.41421354 : f32
      %18 = vector.broadcast %cst_15 : f32 to vector<16x64xf32>
      %19 = arith.divf %15, %18 : vector<16x64xf32>
      %20 = math.absf %19 : vector<16x64xf32>
      %cst_16 = arith.constant 5.000000e-01 : f32
      %21 = vector.broadcast %cst_16 : f32 to vector<16x64xf32>
      %22 = arith.mulf %21, %20 : vector<16x64xf32>
      %cst_17 = arith.constant 1.000000e+00 : f32
      %23 = vector.broadcast %cst_17 : f32 to vector<16x64xf32>
      %24 = arith.addf %23, %22 : vector<16x64xf32>
      %cst_18 = arith.constant 1.000000e+00 : f32
      %25 = vector.broadcast %cst_18 : f32 to vector<16x64xf32>
      %26 = arith.divf %25, %24 : vector<16x64xf32>
      %cst_19 = arith.constant 0.170872763 : f32
      %27 = vector.broadcast %cst_19 : f32 to vector<16x64xf32>
      %28 = arith.mulf %26, %27 : vector<16x64xf32>
      %cst_20 = arith.constant -0.822152256 : f32
      %29 = vector.broadcast %cst_20 : f32 to vector<16x64xf32>
      %30 = arith.addf %29, %28 : vector<16x64xf32>
      %31 = arith.mulf %26, %30 : vector<16x64xf32>
      %cst_21 = arith.constant 1.48851585 : f32
      %32 = vector.broadcast %cst_21 : f32 to vector<16x64xf32>
      %33 = arith.addf %32, %31 : vector<16x64xf32>
      %34 = arith.mulf %26, %33 : vector<16x64xf32>
      %cst_22 = arith.constant -1.13520396 : f32
      %35 = vector.broadcast %cst_22 : f32 to vector<16x64xf32>
      %36 = arith.addf %35, %34 : vector<16x64xf32>
      %37 = arith.mulf %26, %36 : vector<16x64xf32>
      %cst_23 = arith.constant 0.278868079 : f32
      %38 = vector.broadcast %cst_23 : f32 to vector<16x64xf32>
      %39 = arith.addf %38, %37 : vector<16x64xf32>
      %40 = arith.mulf %26, %39 : vector<16x64xf32>
      %cst_24 = arith.constant -0.186288059 : f32
      %41 = vector.broadcast %cst_24 : f32 to vector<16x64xf32>
      %42 = arith.addf %41, %40 : vector<16x64xf32>
      %43 = arith.mulf %26, %42 : vector<16x64xf32>
      %cst_25 = arith.constant 0.0967841818 : f32
      %44 = vector.broadcast %cst_25 : f32 to vector<16x64xf32>
      %45 = arith.addf %44, %43 : vector<16x64xf32>
      %46 = arith.mulf %26, %45 : vector<16x64xf32>
      %cst_26 = arith.constant 0.374091953 : f32
      %47 = vector.broadcast %cst_26 : f32 to vector<16x64xf32>
      %48 = arith.addf %47, %46 : vector<16x64xf32>
      %49 = arith.mulf %26, %48 : vector<16x64xf32>
      %cst_27 = arith.constant 1.00002372 : f32
      %50 = vector.broadcast %cst_27 : f32 to vector<16x64xf32>
      %51 = arith.addf %50, %49 : vector<16x64xf32>
      %52 = arith.mulf %26, %51 : vector<16x64xf32>
      %cst_28 = arith.constant -1.26551223 : f32
      %53 = vector.broadcast %cst_28 : f32 to vector<16x64xf32>
      %54 = arith.addf %53, %52 : vector<16x64xf32>
      %cst_29 = arith.constant 0.000000e+00 : f32
      %55 = vector.broadcast %cst_29 : f32 to vector<16x64xf32>
      %56 = arith.subf %55, %20 : vector<16x64xf32>
      %57 = arith.mulf %56, %20 : vector<16x64xf32>
      %58 = arith.addf %57, %54 : vector<16x64xf32>
      %59 = math.exp %58 : vector<16x64xf32>
      %60 = arith.mulf %26, %59 : vector<16x64xf32>
      %cst_30 = arith.constant 0.000000e+00 : f32
      %61 = vector.broadcast %cst_30 : f32 to vector<16x64xf32>
      %62 = arith.cmpf oge, %19, %61 : vector<16x64xf32>
      %cst_31 = arith.constant 1.000000e+00 : f32
      %63 = vector.broadcast %cst_31 : f32 to vector<16x64xf32>
      %64 = arith.subf %63, %60 : vector<16x64xf32>
      %cst_32 = arith.constant 1.000000e+00 : f32
      %65 = vector.broadcast %cst_32 : f32 to vector<16x64xf32>
      %66 = arith.subf %60, %65 : vector<16x64xf32>
      %67 = arith.select %62, %64, %66 : vector<16x64xi1>, vector<16x64xf32>
      %cst_33 = arith.constant 1.000000e+00 : f32
      %68 = vector.broadcast %cst_33 : f32 to vector<16x64xf32>
      %69 = arith.addf %68, %67 : vector<16x64xf32>
      %70 = arith.mulf %17, %69 : vector<16x64xf32>
      %c0_34 = arith.constant 0 : index
      %c0_35 = arith.constant 0 : index
      %71 = vector.load %arg6[%c0_34, %c0_35] : memref<16x64xf32, #tpu.memory_space<vmem>>, vector<16x64xf32>
      tpu.vector_store %arg6[%c0_34, %c0_35], %70 {strides = array<i32>} : memref<16x64xf32, #tpu.memory_space<vmem>>, vector<16x64xf32>,
    } else {
    }
    return
  }
  func.func @transform_0(%arg0: i32, %arg1: i32, %arg2: i32) -> (i32, i32) {
    %c0_i32 = arith.constant 0 : i32
    return %arg0, %arg2 : i32, i32
  }
  func.func @transform_1(%arg0: i32, %arg1: i32, %arg2: i32) -> (i32, i32) {
    %c0_i32 = arith.constant 0 : i32
    return %arg2, %arg1 : i32, i32
  }
  func.func @transform_2(%arg0: i32, %arg1: i32, %arg2: i32) -> (i32, i32) {
    %c0_i32 = arith.constant 0 : i32
    %c0_i32_0 = arith.constant 0 : i32
    return %c0_i32, %arg1 : i32, i32
  }
  func.func @transform_3(%arg0: i32, %arg1: i32, %arg2: i32) -> (i32, i32) {
    %c0_i32 = arith.constant 0 : i32
    return %arg0, %arg1 : i32, i32
  }
}

module attributes {stable_mosaic.version = 11 : i64} {
  func.func @_matmul_bias_res_ln_kernel(%arg0: i32, %arg1: i32, %arg2: memref<16x64xf32, #tpu.memory_space<vmem>>, %arg3: memref<64x32xf32, #tpu.memory_space<vmem>>, %arg4: memref<1x32xf32, #tpu.memory_space<vmem>>, %arg5: memref<16x32xf32, #tpu.memory_space<vmem>>, %arg6: memref<1x32xf32, #tpu.memory_space<vmem>>, %arg7: memref<1x32xf32, #tpu.memory_space<vmem>>, %arg8: memref<16x32xf32, #tpu.memory_space<vmem>>, %arg9: memref<16x32xf32, #tpu.memory_space<vmem>>) attributes {dimension_semantics = [#tpu.dimension_semantics<parallel>, #tpu.dimension_semantics<arbitrary>], iteration_bounds = array<i64: 1, 1>, scalar_prefetch = 0 : i64, scratch_operands = 1 : i64, tpu.core_type = #tpu.core_type<tc>, window_params = [{transform_indices = @transform_0, window_bounds = array<i64: 16, 64>}, {transform_indices = @transform_1, window_bounds = array<i64: 64, 32>}, {pipeline_mode = #tpu.pipeline_mode<synchronous>, transform_indices = @transform_2, window_bounds = array<i64: 1, 32>}, {transform_indices = @transform_3, window_bounds = array<i64: 16, 32>}, {pipeline_mode = #tpu.pipeline_mode<synchronous>, transform_indices = @transform_4, window_bounds = array<i64: 1, 32>}, {pipeline_mode = #tpu.pipeline_mode<synchronous>, transform_indices = @transform_5, window_bounds = array<i64: 1, 32>}, {transform_indices = @transform_6, window_bounds = array<i64: 16, 32>}]} {
    %c0_i32 = arith.constant 0 : i32
    %0 = arith.cmpi eq, %arg1, %c0_i32 : i32
    %1 = arith.extui %0 : i1 to i32
    %c0_i32_0 = arith.constant 0 : i32
    %2 = arith.cmpi ne, %1, %c0_i32_0 : i32
    scf.if %2 {
      %cst_10 = arith.constant 0.000000e+00 : f32
      %12 = vector.broadcast %cst_10 : f32 to vector<16x32xf32>
      %c0_11 = arith.constant 0 : index
      %c0_12 = arith.constant 0 : index
      %13 = vector.load %arg9[%c0_11, %c0_12] : memref<16x32xf32, #tpu.memory_space<vmem>>, vector<16x32xf32>
      tpu.vector_store %arg9[%c0_11, %c0_12], %12 {strides = array<i32>} : memref<16x32xf32, #tpu.memory_space<vmem>>, vector<16x32xf32>,
    } else {
    }
    %c0 = arith.constant 0 : index
    %c0_1 = arith.constant 0 : index
    %3 = vector.load %arg9[%c0, %c0_1] : memref<16x32xf32, #tpu.memory_space<vmem>>, vector<16x32xf32>
    %c0_2 = arith.constant 0 : index
    %c0_3 = arith.constant 0 : index
    %4 = vector.load %arg2[%c0_2, %c0_3] : memref<16x64xf32, #tpu.memory_space<vmem>>, vector<16x64xf32>
    %c0_4 = arith.constant 0 : index
    %c0_5 = arith.constant 0 : index
    %5 = vector.load %arg3[%c0_4, %c0_5] : memref<64x32xf32, #tpu.memory_space<vmem>>, vector<64x32xf32>
    %cst = arith.constant dense<0.000000e+00> : vector<16x32xf32>
    %6 = tpu.matmul %4, %5, %cst {dimension_numbers = #tpu.dot_dimension_numbers<[1], [0], [0], [1], [0, 0, 1, 1], [], []>} : vector<16x64xf32>, vector<64x32xf32>, vector<16x32xf32> -> vector<16x32xf32>
    %7 = arith.addf %3, %6 : vector<16x32xf32>
    %c0_6 = arith.constant 0 : index
    %c0_7 = arith.constant 0 : index
    %8 = vector.load %arg9[%c0_6, %c0_7] : memref<16x32xf32, #tpu.memory_space<vmem>>, vector<16x32xf32>
    tpu.vector_store %arg9[%c0_6, %c0_7], %7 {strides = array<i32>} : memref<16x32xf32, #tpu.memory_space<vmem>>, vector<16x32xf32>,
    %c0_i32_8 = arith.constant 0 : i32
    %9 = arith.cmpi eq, %arg1, %c0_i32_8 : i32
    %10 = arith.extui %9 : i1 to i32
    %c0_i32_9 = arith.constant 0 : i32
    %11 = arith.cmpi ne, %10, %c0_i32_9 : i32
    scf.if %11 {
      %c0_10 = arith.constant 0 : index
      %c0_11 = arith.constant 0 : index
      %12 = vector.load %arg9[%c0_10, %c0_11] : memref<16x32xf32, #tpu.memory_space<vmem>>, vector<16x32xf32>
      %c0_12 = arith.constant 0 : index
      %c0_13 = arith.constant 0 : index
      %13 = vector.load %arg4[%c0_12, %c0_13] : memref<1x32xf32, #tpu.memory_space<vmem>>, vector<1x32xf32>
      %14 = vector.broadcast %13 : vector<1x32xf32> to vector<16x32xf32>
      %15 = arith.addf %12, %14 : vector<16x32xf32>
      %c0_14 = arith.constant 0 : index
      %c0_15 = arith.constant 0 : index
      %16 = vector.load %arg5[%c0_14, %c0_15] : memref<16x32xf32, #tpu.memory_space<vmem>>, vector<16x32xf32>
      %17 = arith.addf %15, %16 : vector<16x32xf32>
      %cst_16 = arith.constant dense<0.000000e+00> : vector<16xf32>
      %18 = vector.multi_reduction <add>, %17, %cst_16 [1] : vector<16x32xf32> to vector<16xf32>
      %19 = vector.shape_cast %18 : vector<16xf32> to vector<16x1xf32>
      %cst_17 = arith.constant 3.200000e+01 : f32
      %20 = vector.broadcast %cst_17 : f32 to vector<16x1xf32>
      %21 = arith.divf %19, %20 : vector<16x1xf32>
      %22 = vector.broadcast %21 : vector<16x1xf32> to vector<16x32xf32>
      %23 = arith.subf %17, %22 : vector<16x32xf32>
      %24 = arith.mulf %23, %23 : vector<16x32xf32>
      %cst_18 = arith.constant dense<0.000000e+00> : vector<16xf32>
      %25 = vector.multi_reduction <add>, %24, %cst_18 [1] : vector<16x32xf32> to vector<16xf32>
      %26 = vector.shape_cast %25 : vector<16xf32> to vector<16x1xf32>
      %cst_19 = arith.constant 3.200000e+01 : f32
      %27 = vector.broadcast %cst_19 : f32 to vector<16x1xf32>
      %28 = arith.divf %26, %27 : vector<16x1xf32>
      %29 = vector.broadcast %21 : vector<16x1xf32> to vector<16x32xf32>
      %30 = arith.subf %17, %29 : vector<16x32xf32>
      %cst_20 = arith.constant 9.99999996E-13 : f32
      %31 = vector.broadcast %cst_20 : f32 to vector<16x1xf32>
      %32 = arith.addf %28, %31 : vector<16x1xf32>
      %33 = math.sqrt %32 : vector<16x1xf32>
      %34 = vector.broadcast %33 : vector<16x1xf32> to vector<16x32xf32>
      %35 = arith.divf %30, %34 : vector<16x32xf32>
      %c0_21 = arith.constant 0 : index
      %c0_22 = arith.constant 0 : index
      %36 = vector.load %arg6[%c0_21, %c0_22] : memref<1x32xf32, #tpu.memory_space<vmem>>, vector<1x32xf32>
      %37 = vector.broadcast %36 : vector<1x32xf32> to vector<16x32xf32>
      %38 = arith.mulf %37, %35 : vector<16x32xf32>
      %c0_23 = arith.constant 0 : index
      %c0_24 = arith.constant 0 : index
      %39 = vector.load %arg7[%c0_23, %c0_24] : memref<1x32xf32, #tpu.memory_space<vmem>>, vector<1x32xf32>
      %40 = vector.broadcast %39 : vector<1x32xf32> to vector<16x32xf32>
      %41 = arith.addf %38, %40 : vector<16x32xf32>
      %c0_25 = arith.constant 0 : index
      %c0_26 = arith.constant 0 : index
      %42 = vector.load %arg8[%c0_25, %c0_26] : memref<16x32xf32, #tpu.memory_space<vmem>>, vector<16x32xf32>
      tpu.vector_store %arg8[%c0_25, %c0_26], %41 {strides = array<i32>} : memref<16x32xf32, #tpu.memory_space<vmem>>, vector<16x32xf32>,
    } else {
    }
    return
  }
  func.func @transform_0(%arg0: i32, %arg1: i32) -> (i32, i32) {
    %c0_i32 = arith.constant 0 : i32
    return %arg0, %arg1 : i32, i32
  }
  func.func @transform_1(%arg0: i32, %arg1: i32) -> (i32, i32) {
    %c0_i32 = arith.constant 0 : i32
    %c0_i32_0 = arith.constant 0 : i32
    return %arg1, %c0_i32 : i32, i32
  }
  func.func @transform_2(%arg0: i32, %arg1: i32) -> (i32, i32) {
    %c0_i32 = arith.constant 0 : i32
    %c0_i32_0 = arith.constant 0 : i32
    %c0_i32_1 = arith.constant 0 : i32
    return %c0_i32, %c0_i32_0 : i32, i32
  }
  func.func @transform_3(%arg0: i32, %arg1: i32) -> (i32, i32) {
    %c0_i32 = arith.constant 0 : i32
    %c0_i32_0 = arith.constant 0 : i32
    return %arg0, %c0_i32 : i32, i32
  }
  func.func @transform_4(%arg0: i32, %arg1: i32) -> (i32, i32) {
    %c0_i32 = arith.constant 0 : i32
    %c0_i32_0 = arith.constant 0 : i32
    %c0_i32_1 = arith.constant 0 : i32
    return %c0_i32, %c0_i32_0 : i32, i32
  }
  func.func @transform_5(%arg0: i32, %arg1: i32) -> (i32, i32) {
    %c0_i32 = arith.constant 0 : i32
    %c0_i32_0 = arith.constant 0 : i32
    %c0_i32_1 = arith.constant 0 : i32
    return %c0_i32, %c0_i32_0 : i32, i32
  }
  func.func @transform_6(%arg0: i32, %arg1: i32) -> (i32, i32) {
    %c0_i32 = arith.constant 0 : i32
    %c0_i32_0 = arith.constant 0 : i32
    return %arg0, %c0_i32 : i32, i32
  }
}

</mosaic_0001>

<llo_original>
// kernel: transformer_model_forward.12
$region0: #{transformer_model_forward.12}
  #allocation0 [shape = 'u32[]', space=smem, size = 0x4, offset = 0x4, fixed_abs, tag = 'smem constant byte address 0x4 - core index']
  #allocation1 [shape = 'u32[144,128]{1,0:T(1,128)}', space=vmem, size = 0x12000, scoped, tag = 'internal scratch']
  #allocation2 [shape = 'f32[16,96]{1,0:T(8,128)}', space=vmem, size = 0x2000, scoped, tag = 'scratch operand']
  %s0 = inlined_call_operand.vmem [shape: f32[16,32], index: 0, kind: input, shape index: {}]
  %s1 = inlined_call_operand.vmem [shape: f32[32,96], index: 1, kind: input, shape index: {}]
  %s2 = inlined_call_operand.vmem [shape: f32[1,96], index: 2, kind: input, shape index: {}]
  %s3 = inlined_call_operand.vmem [shape: f32[16,96], index: 3, kind: output, shape index: {}]
  %s4 = sld [smem:[#allocation0]]
  $region30: #{transformer_model_forward.12} parent=0
    _
  %s6 = ssub.s32 1, %s4
  %s7 = scalar_select 0, %s6, %s4
  // Predicated region
  $region2: #{transformer_model_forward.12} parent=0 // pred_check
    _
  $region3: #{transformer_model_forward.12} parent=0 // pred_check_branch
    %9 = sbr.rel (0) target = $region5
  $region4: #{transformer_model_forward.12} parent=0 // pred_region
    _
  $region5: #{transformer_model_forward.12} parent=0 // pred_fallthru
    _
  // Predicated region
  $region6: #{transformer_model_forward.12} parent=0 // pred_check
    _
  $region7: #{transformer_model_forward.12} parent=0 // pred_check_branch
    %11 = sbr.rel (0) target = $region9
  $region8: #{transformer_model_forward.12} parent=0 // pred_region
    _
  $region9: #{transformer_model_forward.12} parent=0 // pred_fallthru
    _
  // Predicated region
  $region10: #{transformer_model_forward.12} parent=0 // pred_check
    _
  $region11: #{transformer_model_forward.12} parent=0 // pred_check_branch
    %13 = sbr.rel (0) target = $region13
  $region12: #{transformer_model_forward.12} parent=0 // pred_region
    _
  $region13: #{transformer_model_forward.12} parent=0 // pred_fallthru
    _
  %p14 = scmp.eq.s32.totalorder 0, 0
  // Predicated region
  $region14: #{transformer_model_forward.12} parent=0 // pred_check
    %p15 = pneg %p14
  $region15: #{transformer_model_forward.12} parent=0 // pred_check_branch
    %17 = sbr.rel (%p15) target = $region17
  $region16: #{transformer_model_forward.12} parent=0 // pred_region
    %vm18 = vcmask 785408
    %19 = vst.msk [vmem:[#allocation2] sm:$0xff] %vm18, 0.0
    %20 = vst.msk [vmem:[#allocation2 + $0x8] sm:$0xff] %vm18, 0.0
  $region17: #{transformer_model_forward.12} parent=0 // pred_fallthru
    _
  %v21 = vld [vmem:[#allocation2] sm:$0xff]
  %v22 = vld [vmem:[#allocation2 + $0x8] sm:$0xff]
  %v23 = vld [vmem:[%s0] sm:$0xff]
  %v24 = vld [vmem:[%s0 + $0x8] sm:$0xff]
  %v25 = vld [vmem:[%s1] sm:$0xff]
  %v26 = vld [vmem:[%s1 + $0x8] sm:$0xff]
  %v27 = vld [vmem:[%s1 + $0x10] sm:$0xff]
  %v28 = vld [vmem:[%s1 + $0x18] sm:$0xff]
  %vm29 = vcmask 261120
  %v31 = vsel %vm29, %v23, 0
  %v34 = vsel %vm29, %v24, 0
  %36 = vmatprep.subr.mxu0 0.0
  %37 = vmatpush1.msra.mxu0 %v25
  %38 = vmatprep.subr.mxu0 0.0
  %39 = vmatpush1.msra.mxu0 %v26
  %40 = vmatprep.subr.mxu0 0.0
  %41 = vmatpush1.msra.mxu0 %v27
  %42 = vmatprep.subr.mxu0 0.0
  %43 = vmatpush1.msra.mxu0 %v28
  %44 = vmatprep.subr.mxu0 0.0
  %45 = vmatpush1.msra.mxu0 0.0
  %46 = vmatprep.subr.mxu0 0.0
  %47 = vmatpush1.msra.mxu0 0.0
  %48 = vmatprep.subr.mxu0 0.0
  %49 = vmatpush1.msra.mxu0 0.0
  %50 = vmatprep.subr.mxu0 0.0
  %51 = vmatpush1.msra.mxu0 0.0
  %52 = vmatprep.subr.mxu0 0.0
  %53 = vmatpush1.msra.mxu0 0.0
  %54 = vmatprep.subr.mxu0 0.0
  %55 = vmatpush1.msra.mxu0 0.0
  %56 = vmatprep.subr.mxu0 0.0
  %57 = vmatpush1.msra.mxu0 0.0
  %58 = vmatprep.subr.mxu0 0.0
  %59 = vmatpush1.msra.mxu0 0.0
  %60 = vmatprep.subr.mxu0 0.0
  %61 = vmatpush1.msra.mxu0 0.0
  %62 = vmatprep.subr.mxu0 0.0
  %63 = vmatpush1.msra.mxu0 0.0
  %64 = vmatprep.subr.mxu0 0.0
  %65 = vmatpush1.msra.mxu0 0.0
  %66 = vmatprep.subr.mxu0 0.0
  %67 = vmatpush1.msra.mxu0 0.0
  %68 = vmatprep.subr.mxu0 0.0
  %69 = vmatpush1.msra.mxu0 0.0
  %70 = vmatprep.subr.mxu0 0.0
  %71 = vmatpush1.msra.mxu0 0.0
  %72 = vmatprep.subr.mxu0 0.0
  %73 = vmatpush1.msra.mxu0 0.0
  %74 = vmatprep.subr.mxu0 0.0
  %75 = vmatpush1.msra.mxu0 0.0
  %76 = vmatprep.subr.mxu0 0.0
  %77 = vmatpush1.msra.mxu0 0.0
  %78 = vmatprep.subr.mxu0 0.0
  %79 = vmatpush1.msra.mxu0 0.0
  %80 = vmatprep.subr.mxu0 0.0
  %81 = vmatpush1.msra.mxu0 0.0
  %82 = vmatprep.subr.mxu0 0.0
  %83 = vmatpush1.msra.mxu0 0.0
  %84 = vmatprep.subr.mxu0 0.0
  %85 = vmatpush1.msra.mxu0 0.0
  %86 = vmatprep.subr.mxu0 0.0
  %87 = vmatpush1.msra.mxu0 0.0
  %88 = vmatprep.subr.mxu0 0.0
  %89 = vmatpush1.msra.mxu0 0.0
  %90 = vmatprep.subr.mxu0 0.0
  %91 = vmatpush1.msra.mxu0 0.0
  %92 = vmatprep.subr.mxu0 0.0
  %93 = vmatpush1.msra.mxu0 0.0
  %94 = vmatprep.subr.mxu0 0.0
  %95 = vmatpush1.msra.mxu0 0.0
  %96 = vmatprep.subr.mxu0 0.0
  %97 = vmatpush1.msra.mxu0 0.0
  %98 = vmatprep.subr.mxu0 0.0
  %99 = vmatpush1.msra.mxu0 0.0
  %100 = vmatprep.mubr.f32.mxu0 0.0
  %101 = vmatmul.mubr.f32.gmra.mrb[0].mxu0 %v31
  %v102 = vpop.f32.mrb[0].mxu0
  %v103 = vadd.f32 0.0, %v102
  %v104 = vpop.f32.mrb[0].mxu0
  %105 = vmatprep.mubr.f32.mxu0 0.0
  %106 = vmatmul.mubr.f32.gmra.mrb[0].mxu0 %v34
  %v107 = vpop.f32.mrb[0].mxu0
  %v108 = vadd.f32 0.0, %v107
  %v109 = vpop.f32.mrb[0].mxu0
  %110 = vdwg.mxu0
  %v111 = vadd.f32 %v21, %v103
  %v112 = vadd.f32 %v22, %v108
  %vm113 = vcmask 785408
  %114 = vst.msk [vmem:[#allocation2] sm:$0xff] %vm113, %v111
  %115 = vst.msk [vmem:[#allocation2 + $0x8] sm:$0xff] %vm113, %v112
  // Predicated region
  $region18: #{transformer_model_forward.12} parent=0 // pred_check
    %p116 = pneg %p14
  $region19: #{transformer_model_forward.12} parent=0 // pred_check_branch
    %118 = sbr.rel (%p116) target = $region21
  $region20: #{transformer_model_forward.12} parent=0 // pred_region
    %v119 = vld [vmem:[#allocation2] sm:$0xff]
    %v120 = vld [vmem:[#allocation2 + $0x8] sm:$0xff]
    %v121 = vld [vmem:[%s2] sm:$0x1]
    %v123 = vlaneseq
    %v124 = vshrl.u32 %v123, 7
    %v125 = vsub.s32 0, %v124
    %v126 = vrot.slane %v121, %v125
    %v128 = vadd.f32 %v119, %v126
    %v129 = vadd.f32 %v120, %v126
    %130 = vst.msk [vmem:[%s3] sm:$0xff] %vm113, %v128
    %131 = vst.msk [vmem:[%s3 + $0x8] sm:$0xff] %vm113, %v129
  $region21: #{transformer_model_forward.12} parent=0 // pred_fallthru
    _
  // Predicated region
  $region22: #{transformer_model_forward.12} parent=0 // pred_check
    _
  $region23: #{transformer_model_forward.12} parent=0 // pred_check_branch
    %133 = sbr.rel (0) target = $region25
  $region24: #{transformer_model_forward.12} parent=0 // pred_region
    _
  $region25: #{transformer_model_forward.12} parent=0 // pred_fallthru
    _
  // Predicated region
  $region26: #{transformer_model_forward.12} parent=0 // pred_check
    _
  $region27: #{transformer_model_forward.12} parent=0 // pred_check_branch
    %135 = sbr.rel (0) target = $region29
  $region28: #{transformer_model_forward.12} parent=0 // pred_region
    _
  $region29: #{transformer_model_forward.12} parent=0 // pred_fallthru
    _

// kernel: transformer_model_forward.13
$region0: #{transformer_model_forward.13}
  #allocation0 [shape = 'u32[]', space=smem, size = 0x4, offset = 0x4, fixed_abs, tag = 'smem constant byte address 0x4 - core index']
  #allocation1 [shape = 'u32[144,128]{1,0:T(1,128)}', space=vmem, size = 0x12000, scoped, tag = 'internal scratch']
  %s0 = inlined_call_operand.vmem [shape: f32[2,8,96], index: 0, kind: input, shape index: {}]
  %s1 = inlined_call_operand.vmem [shape: f32[2,1,8], index: 1, kind: input, shape index: {}]
  %s2 = inlined_call_operand.vmem [shape: f32[2,8,32], index: 2, kind: output, shape index: {}]
  %s3 = sld [smem:[#allocation0]]
  $region41: #{transformer_model_forward.13} parent=0
    _
  %s5 = ssub.s32 1, %s3
  %s6 = scalar_select 0, %s5, %s3
  loop: start=0, step=1, limit=4
  $region2: #{transformer_model_forward.13} parent=0 // loop_pre_header
    _
  $region3: #{transformer_model_forward.13} parent=0 // loop_header
    %s8 = sphi 0, %s12
    %p9 = scmp.ge.s32.totalorder %s8, 4
    %s18 = sphi 0, %s20
    %s21 = sphi 0, %s18
    %s22 = sphi 0, %s21
    %s38 = sphi 0, %s22
    %s44 = sphi 0, %s46
    %s47 = sphi 0, %s44
    %s48 = sphi 0, %s47
    %s64 = sphi 0, %s48
    %s70 = sphi 0, %s72
    %s73 = sphi 0, %s70
    %s74 = sphi 0, %s73
    %s90 = sphi 0, %s74
  $region4: #{transformer_model_forward.13} parent=0 // loop_header_branch
    %11 = sbr.rel (%p9) target = $region8
  $region5: #{transformer_model_forward.13} parent=0 // loop_body
    %s13 = ssub.s32 %s8, 1
    %s14 = ssub.s32 %s8, 2
    %s15 = sadd.s32 %s8, 1
    %s16 = ssub.s32 %s8, %s15
    %p17 = scmp.eq.s32.totalorder %s16, 0
    %s19 = sadd.s32 %s18, 1
    %s20 = scalar_select %p17, %s18, %s19
    %p23 = pneg %p17
    %p24 = scmp.eq.s32.totalorder %s8, 1
    %p25 = por %p23, %p24
    %p26 = scmp.ne.s32.totalorder %s18, %s21
    %p27 = scmp.eq.s32.totalorder %s8, 0
    %p28 = por %p26, %p27
    %p29 = scmp.ne.s32.totalorder %s18, %s21
    %p30 = scmp.eq.s32.totalorder %s13, 1
    %p31 = por %p29, %p30
    %p32 = scmp.ne.s32.totalorder %s21, %s22
    %p33 = scmp.eq.s32.totalorder %s13, 0
    %p34 = por %p32, %p33
    %p35 = scmp.ne.s32.totalorder %s21, %s22
    %p36 = scmp.eq.s32.totalorder %s14, 1
    %p37 = por %p35, %p36
    %p39 = scmp.ne.s32.totalorder %s22, %s38
    %p40 = scmp.eq.s32.totalorder %s14, 0
    %p41 = por %p39, %p40
    %s42 = ssub.s32 %s8, %s15
    %p43 = scmp.eq.s32.totalorder %s42, 0
    %s45 = sadd.s32 %s44, 1
    %s46 = scalar_select %p43, %s44, %s45
    %p49 = pneg %p43
    %p50 = scmp.eq.s32.totalorder %s8, 1
    %p51 = por %p49, %p50
    %p52 = scmp.ne.s32.totalorder %s44, %s47
    %p53 = scmp.eq.s32.totalorder %s8, 0
    %p54 = por %p52, %p53
    %p55 = scmp.ne.s32.totalorder %s44, %s47
    %p56 = scmp.eq.s32.totalorder %s13, 1
    %p57 = por %p55, %p56
    %p58 = scmp.ne.s32.totalorder %s47, %s48
    %p59 = scmp.eq.s32.totalorder %s13, 0
    %p60 = por %p58, %p59
    %p61 = scmp.ne.s32.totalorder %s47, %s48
    %p62 = scmp.eq.s32.totalorder %s14, 1
    %p63 = por %p61, %p62
    %p65 = scmp.ne.s32.totalorder %s48, %s64
    %p66 = scmp.eq.s32.totalorder %s14, 0
    %p67 = por %p65, %p66
    %s68 = ssub.s32 %s8, %s15
    %p69 = scmp.eq.s32.totalorder %s68, 0
    %s71 = sadd.s32 %s70, 1
    %s72 = scalar_select %p69, %s70, %s71
    %p75 = pneg %p69
    %p76 = scmp.eq.s32.totalorder %s8, 1
    %p77 = por %p75, %p76
    %p78 = scmp.ne.s32.totalorder %s70, %s73
    %p79 = scmp.eq.s32.totalorder %s8, 0
    %p80 = por %p78, %p79
    %p81 = scmp.ne.s32.totalorder %s70, %s73
    %p82 = scmp.eq.s32.totalorder %s13, 1
    %p83 = por %p81, %p82
    %p84 = scmp.ne.s32.totalorder %s73, %s74
    %p85 = scmp.eq.s32.totalorder %s13, 0
    %p86 = por %p84, %p85
    %p87 = scmp.ne.s32.totalorder %s73, %s74
    %p88 = scmp.eq.s32.totalorder %s14, 1
    %p89 = por %p87, %p88
    %p91 = scmp.ne.s32.totalorder %s74, %s90
    %p92 = scmp.eq.s32.totalorder %s14, 0
    %p93 = por %p91, %p92
    %p94 = scmp.le.s32.totalorder 1, %s8
    %p95 = scmp.lt.s32.totalorder %s8, 3
    %p96 = pnand %p94, %p95
    %p97 = pneg %p96
    // Predicated region
    $region9: #{transformer_model_forward.13} parent=5 // pred_check
      _
    $region10: #{transformer_model_forward.13} parent=5 // pred_check_branch
      %99 = sbr.rel (%p96) target = $region12
    $region11: #{transformer_model_forward.13} parent=5 // pred_region
      %s100 = ssub.s32 %s8, 1
    $region12: #{transformer_model_forward.13} parent=5 // pred_fallthru
      _
    %p101 = scmp.lt.s32.totalorder %s8, 2
    // Predicated region
    $region13: #{transformer_model_forward.13} parent=5 // pred_check
      %p102 = pneg %p101
    $region14: #{transformer_model_forward.13} parent=5 // pred_check_branch
      %104 = sbr.rel (%p102) target = $region16
    $region15: #{transformer_model_forward.13} parent=5 // pred_region
      // Predicated region
      $region17: #{transformer_model_forward.13} parent=15 // pred_check
        %p105 = pneg %p28
      $region18: #{transformer_model_forward.13} parent=15 // pred_check_branch
        %107 = sbr.rel (%p105) target = $region20
      $region19: #{transformer_model_forward.13} parent=15 // pred_region
        %p108 = scmp.lt.s32.totalorder %s8, 1
        %s109 = scalar_select %p108, %s8, 1
        %s110 = smul.addr %s109, 8
        %s111 = scalar_lea.vmem %s0, %s110
      $region20: #{transformer_model_forward.13} parent=15 // pred_fallthru
        _
      // Predicated region
      $region21: #{transformer_model_forward.13} parent=15 // pred_check
        %p112 = pneg %p54
      $region22: #{transformer_model_forward.13} parent=15 // pred_check_branch
        %114 = sbr.rel (%p112) target = $region24
      $region23: #{transformer_model_forward.13} parent=15 // pred_region
        %p115 = scmp.lt.s32.totalorder %s8, 1
        %s116 = scalar_select %p115, %s8, 1
        %s117 = scalar_lea.vmem %s1, %s116
      $region24: #{transformer_model_forward.13} parent=15 // pred_fallthru
        _
    $region16: #{transformer_model_forward.13} parent=5 // pred_fallthru
      _
    %p118 = scmp.le.s32.totalorder 1, %s8
    %p119 = scmp.lt.s32.totalorder %s8, 3
    %p120 = pnand %p118, %p119
    %p121 = pneg %p120
    // Predicated region
    $region25: #{transformer_model_forward.13} parent=5 // pred_check
      _
    $region26: #{transformer_model_forward.13} parent=5 // pred_check_branch
      %123 = sbr.rel (%p120) target = $region28
    $region27: #{transformer_model_forward.13} parent=5 // pred_region
      %s124 = ssub.s32 %s8, 1
      %p125 = scmp.lt.s32.totalorder %s13, 1
      %s126 = scalar_select %p125, %s13, 1
      %s127 = smul.addr %s126, 8
      %s128 = scalar_lea.vmem %s0, %s127
      %p129 = pneg %p34
      %p130 = pneg %p31
      %p131 = scmp.lt.s32.totalorder %s13, 1
      %s132 = scalar_select %p131, %s13, 1
      %s133 = scalar_lea.vmem %s1, %s132
      %p134 = pneg %p60
      %p135 = pneg %p57
      %p136 = pneg %p86
      %p137 = pneg %p83
      %p138 = scmp.lt.s32.totalorder %s13, 1
      %s139 = scalar_select %p138, %s13, 1
      %s140 = smul.addr %s139, 8
      %s141 = scalar_lea.vmem %s2, %s140
      %p142 = scmp.lt.s32.totalorder %s13, 1
      %s143 = scalar_select %p142, %s13, 1
      %s144 = smul.addr %s143, 8
      %s145 = scalar_lea.vmem %s0, %s144
      %p146 = scmp.lt.s32.totalorder %s13, 1
      %s147 = scalar_select %p146, %s13, 1
      %s148 = scalar_lea.vmem %s1, %s147
      %p149 = scmp.lt.s32.totalorder %s13, 1
      %s150 = scalar_select %p149, %s13, 1
      %s151 = smul.addr %s150, 8
      %s152 = scalar_lea.vmem %s2, %s151
      %v153 = vld [vmem:[%s148] sm:$0x1]
      %v154 = vld [vmem:[%s145] sm:$0xff]
      %156 = vrot.lane.b32.xlu0 %v154, 96
      %v157 = vpop.permute.xlu0 %156
      %vm158 = vcmask 64512
      %v159 = vsel %vm158, %v154, 0
      %v161 = vsel %vm158, %v157, 0
      %163 = vmatprep.subr.mxu0 0.0
      %164 = vmatpush1.xpose.msra.mxu0 %v161
      %165 = vmatprep.subr.mxu0 0.0
      %166 = vmatpush1.xpose.msra.mxu0 0.0
      %167 = vmatprep.subr.mxu0 0.0
      %168 = vmatpush1.xpose.msra.mxu0 0.0
      %169 = vmatprep.subr.mxu0 0.0
      %170 = vmatpush1.xpose.msra.mxu0 0.0
      %171 = vmatprep.subr.mxu0 0.0
      %172 = vmatpush1.xpose.msra.mxu0 0.0
      %173 = vmatprep.subr.mxu0 0.0
      %174 = vmatpush1.xpose.msra.mxu0 0.0
      %175 = vmatprep.subr.mxu0 0.0
      %176 = vmatpush1.xpose.msra.mxu0 0.0
      %177 = vmatprep.subr.mxu0 0.0
      %178 = vmatpush1.xpose.msra.mxu0 0.0
      %179 = vmatprep.subr.mxu0 0.0
      %180 = vmatpush1.xpose.msra.mxu0 0.0
      %181 = vmatprep.subr.mxu0 0.0
      %182 = vmatpush1.xpose.msra.mxu0 0.0
      %183 = vmatprep.subr.mxu0 0.0
      %184 = vmatpush1.xpose.msra.mxu0 0.0
      %185 = vmatprep.subr.mxu0 0.0
      %186 = vmatpush1.xpose.msra.mxu0 0.0
      %187 = vmatprep.subr.mxu0 0.0
      %188 = vmatpush1.xpose.msra.mxu0 0.0
      %189 = vmatprep.subr.mxu0 0.0
      %190 = vmatpush1.xpose.msra.mxu0 0.0
      %191 = vmatprep.subr.mxu0 0.0
      %192 = vmatpush1.xpose.msra.mxu0 0.0
      %193 = vmatprep.subr.mxu0 0.0
      %194 = vmatpush1.xpose.msra.mxu0 0.0
      %195 = vmatprep.subr.mxu0 0.0
      %196 = vmatpush1.xpose.msra.mxu0 0.0
      %197 = vmatprep.subr.mxu0 0.0
      %198 = vmatpush1.xpose.msra.mxu0 0.0
      %199 = vmatprep.subr.mxu0 0.0
      %200 = vmatpush1.xpose.msra.mxu0 0.0
      %201 = vmatprep.subr.mxu0 0.0
      %202 = vmatpush1.xpose.msra.mxu0 0.0
      %203 = vmatprep.subr.mxu0 0.0
      %204 = vmatpush1.xpose.msra.mxu0 0.0
      %205 = vmatprep.subr.mxu0 0.0
      %206 = vmatpush1.xpose.msra.mxu0 0.0
      %207 = vmatprep.subr.mxu0 0.0
      %208 = vmatpush1.xpose.msra.mxu0 0.0
      %209 = vmatprep.subr.mxu0 0.0
      %210 = vmatpush1.xpose.msra.mxu0 0.0
      %211 = vmatprep.subr.mxu0 0.0
      %212 = vmatpush1.xpose.msra.mxu0 0.0
      %213 = vmatprep.subr.mxu0 0.0
      %214 = vmatpush1.xpose.msra.mxu0 0.0
      %215 = vmatprep.subr.mxu0 0.0
      %216 = vmatpush1.xpose.msra.mxu0 0.0
      %217 = vmatprep.subr.mxu0 0.0
      %218 = vmatpush1.xpose.msra.mxu0 0.0
      %219 = vmatprep.subr.mxu0 0.0
      %220 = vmatpush1.xpose.msra.mxu0 0.0
      %221 = vmatprep.subr.mxu0 0.0
      %222 = vmatpush1.xpose.msra.mxu0 0.0
      %223 = vmatprep.subr.mxu0 0.0
      %224 = vmatpush1.xpose.msra.mxu0 0.0
      %225 = vmatprep.subr.mxu0 0.0
      %226 = vmatpush1.xpose.msra.mxu0 0.0
      %227 = vmatprep.mubr.f32.mxu0 0.0
      %228 = vmatmul.mubr.f32.gmra.mrb[0].mxu0 %v159
      %v229 = vpop.f32.mrb[0].mxu0
      %v230 = vadd.f32 0.0, %v229
      %v231 = vpop.f32.mrb[0].mxu0
      %232 = vdwg.mxu0
      %v233 = vmul.f32 %v230, 0.35355338
      %v235 = vlaneseq
      %v236 = vshrl.u32 %v235, 7
      %v237 = vsub.s32 0, %v236
      %v238 = vrot.slane %v153, %v237
      %v240 = vadd.f32 %v233, %v238
      %v241 = vsel %vm158, %v240, -inf
      %242 = vmax.xlane.f32.xlu0 %v241
      %v243 = vpop.xlane.xlu0 %242
      %v244 = vsub.f32 %v240, %v243
      %v245 = vmul.f32 %v244, 1.442695
      %v246 = vpow.pop %v245
      %v247 = vsel %vm158, %v246, 0.0
      %248 = vadd.xlane.f32.xlu0 %v247
      %v249 = vpop.xlane.xlu0 %248
      %v250 = vrcp.pop %v249
      %v251 = vmul.f32 %v246, %v250
      %252 = vrot.lane.b32.xlu0 %v154, 64
      %v253 = vpop.permute.xlu0 %252
      %v256 = vsel %vm158, %v251, 0
      %258 = vmatprep.subr.mxu0 0.0
      %259 = vmatpush1.msra.mxu0 %v253
      %260 = vmatprep.subr.mxu0 0.0
      %261 = vmatpush1.msra.mxu0 0.0
      %262 = vmatprep.subr.mxu0 0.0
      %263 = vmatpush1.msra.mxu0 0.0
      %264 = vmatprep.subr.mxu0 0.0
      %265 = vmatpush1.msra.mxu0 0.0
      %266 = vmatprep.subr.mxu0 0.0
      %267 = vmatpush1.msra.mxu0 0.0
      %268 = vmatprep.subr.mxu0 0.0
      %269 = vmatpush1.msra.mxu0 0.0
      %270 = vmatprep.subr.mxu0 0.0
      %271 = vmatpush1.msra.mxu0 0.0
      %272 = vmatprep.subr.mxu0 0.0
      %273 = vmatpush1.msra.mxu0 0.0
      %274 = vmatprep.subr.mxu0 0.0
      %275 = vmatpush1.msra.mxu0 0.0
      %276 = vmatprep.subr.mxu0 0.0
      %277 = vmatpush1.msra.mxu0 0.0
      %278 = vmatprep.subr.mxu0 0.0
      %279 = vmatpush1.msra.mxu0 0.0
      %280 = vmatprep.subr.mxu0 0.0
      %281 = vmatpush1.msra.mxu0 0.0
      %282 = vmatprep.subr.mxu0 0.0
      %283 = vmatpush1.msra.mxu0 0.0
      %284 = vmatprep.subr.mxu0 0.0
      %285 = vmatpush1.msra.mxu0 0.0
      %286 = vmatprep.subr.mxu0 0.0
      %287 = vmatpush1.msra.mxu0 0.0
      %288 = vmatprep.subr.mxu0 0.0
      %289 = vmatpush1.msra.mxu0 0.0
      %290 = vmatprep.subr.mxu0 0.0
      %291 = vmatpush1.msra.mxu0 0.0
      %292 = vmatprep.subr.mxu0 0.0
      %293 = vmatpush1.msra.mxu0 0.0
      %294 = vmatprep.subr.mxu0 0.0
      %295 = vmatpush1.msra.mxu0 0.0
      %296 = vmatprep.subr.mxu0 0.0
      %297 = vmatpush1.msra.mxu0 0.0
      %298 = vmatprep.subr.mxu0 0.0
      %299 = vmatpush1.msra.mxu0 0.0
      %300 = vmatprep.subr.mxu0 0.0
      %301 = vmatpush1.msra.mxu0 0.0
      %302 = vmatprep.subr.mxu0 0.0
      %303 = vmatpush1.msra.mxu0 0.0
      %304 = vmatprep.subr.mxu0 0.0
      %305 = vmatpush1.msra.mxu0 0.0
      %306 = vmatprep.subr.mxu0 0.0
      %307 = vmatpush1.msra.mxu0 0.0
      %308 = vmatprep.subr.mxu0 0.0
      %309 = vmatpush1.msra.mxu0 0.0
      %310 = vmatprep.subr.mxu0 0.0
      %311 = vmatpush1.msra.mxu0 0.0
      %312 = vmatprep.subr.mxu0 0.0
      %313 = vmatpush1.msra.mxu0 0.0
      %314 = vmatprep.subr.mxu0 0.0
      %315 = vmatpush1.msra.mxu0 0.0
      %316 = vmatprep.subr.mxu0 0.0
      %317 = vmatpush1.msra.mxu0 0.0
      %318 = vmatprep.subr.mxu0 0.0
      %319 = vmatpush1.msra.mxu0 0.0
      %320 = vmatprep.subr.mxu0 0.0
      %321 = vmatpush1.msra.mxu0 0.0
      %322 = vmatprep.mubr.f32.mxu0 0.0
      %323 = vmatmul.mubr.f32.gmra.mrb[0].mxu0 %v256
      %v324 = vpop.f32.mrb[0].mxu0
      %v325 = vadd.f32 0.0, %v324
      %v326 = vpop.f32.mrb[0].mxu0
      %327 = vdwg.mxu0
      %328 = vst.msk [vmem:[%s152] sm:$0xff] %vm158, %v325
      %v329 = vld [vmem:[%s145] sm:$0xff]
      %331 = vrot.lane.b32.xlu0 %v329, 120
      %v332 = vpop.permute.xlu0 %331
      %333 = vrot.lane.b32.xlu0 %v329, 88
      %v334 = vpop.permute.xlu0 %333
      %v335 = vsel %vm158, %v332, 0
      %v337 = vsel %vm158, %v334, 0
      %339 = vmatprep.subr.mxu0 0.0
      %340 = vmatpush1.xpose.msra.mxu0 %v337
      %341 = vmatprep.subr.mxu0 0.0
      %342 = vmatpush1.xpose.msra.mxu0 0.0
      %343 = vmatprep.subr.mxu0 0.0
      %344 = vmatpush1.xpose.msra.mxu0 0.0
      %345 = vmatprep.subr.mxu0 0.0
      %346 = vmatpush1.xpose.msra.mxu0 0.0
      %347 = vmatprep.subr.mxu0 0.0
      %348 = vmatpush1.xpose.msra.mxu0 0.0
      %349 = vmatprep.subr.mxu0 0.0
      %350 = vmatpush1.xpose.msra.mxu0 0.0
      %351 = vmatprep.subr.mxu0 0.0
      %352 = vmatpush1.xpose.msra.mxu0 0.0
      %353 = vmatprep.subr.mxu0 0.0
      %354 = vmatpush1.xpose.msra.mxu0 0.0
      %355 = vmatprep.subr.mxu0 0.0
      %356 = vmatpush1.xpose.msra.mxu0 0.0
      %357 = vmatprep.subr.mxu0 0.0
      %358 = vmatpush1.xpose.msra.mxu0 0.0
      %359 = vmatprep.subr.mxu0 0.0
      %360 = vmatpush1.xpose.msra.mxu0 0.0
      %361 = vmatprep.subr.mxu0 0.0
      %362 = vmatpush1.xpose.msra.mxu0 0.0
      %363 = vmatprep.subr.mxu0 0.0
      %364 = vmatpush1.xpose.msra.mxu0 0.0
      %365 = vmatprep.subr.mxu0 0.0
      %366 = vmatpush1.xpose.msra.mxu0 0.0
      %367 = vmatprep.subr.mxu0 0.0
      %368 = vmatpush1.xpose.msra.mxu0 0.0
      %369 = vmatprep.subr.mxu0 0.0
      %370 = vmatpush1.xpose.msra.mxu0 0.0
      %371 = vmatprep.subr.mxu0 0.0
      %372 = vmatpush1.xpose.msra.mxu0 0.0
      %373 = vmatprep.subr.mxu0 0.0
      %374 = vmatpush1.xpose.msra.mxu0 0.0
      %375 = vmatprep.subr.mxu0 0.0
      %376 = vmatpush1.xpose.msra.mxu0 0.0
      %377 = vmatprep.subr.mxu0 0.0
      %378 = vmatpush1.xpose.msra.mxu0 0.0
      %379 = vmatprep.subr.mxu0 0.0
      %380 = vmatpush1.xpose.msra.mxu0 0.0
      %381 = vmatprep.subr.mxu0 0.0
      %382 = vmatpush1.xpose.msra.mxu0 0.0
      %383 = vmatprep.subr.mxu0 0.0
      %384 = vmatpush1.xpose.msra.mxu0 0.0
      %385 = vmatprep.subr.mxu0 0.0
      %386 = vmatpush1.xpose.msra.mxu0 0.0
      %387 = vmatprep.subr.mxu0 0.0
      %388 = vmatpush1.xpose.msra.mxu0 0.0
      %389 = vmatprep.subr.mxu0 0.0
      %390 = vmatpush1.xpose.msra.mxu0 0.0
      %391 = vmatprep.subr.mxu0 0.0
      %392 = vmatpush1.xpose.msra.mxu0 0.0
      %393 = vmatprep.subr.mxu0 0.0
      %394 = vmatpush1.xpose.msra.mxu0 0.0
      %395 = vmatprep.subr.mxu0 0.0
      %396 = vmatpush1.xpose.msra.mxu0 0.0
      %397 = vmatprep.subr.mxu0 0.0
      %398 = vmatpush1.xpose.msra.mxu0 0.0
      %399 = vmatprep.subr.mxu0 0.0
      %400 = vmatpush1.xpose.msra.mxu0 0.0
      %401 = vmatprep.subr.mxu0 0.0
      %402 = vmatpush1.xpose.msra.mxu0 0.0
      %403 = vmatprep.mubr.f32.mxu0 0.0
      %404 = vmatmul.mubr.f32.gmra.mrb[0].mxu0 %v335
      %v405 = vpop.f32.mrb[0].mxu0
      %v406 = vadd.f32 0.0, %v405
      %v407 = vpop.f32.mrb[0].mxu0
      %408 = vdwg.mxu0
      %v409 = vmul.f32 %v406, 0.35355338
      %v410 = vadd.f32 %v409, %v238
      %v411 = vsel %vm158, %v410, -inf
      %412 = vmax.xlane.f32.xlu0 %v411
      %v413 = vpop.xlane.xlu0 %412
      %v414 = vsub.f32 %v410, %v413
      %v415 = vmul.f32 %v414, 1.442695
      %v416 = vpow.pop %v415
      %v417 = vsel %vm158, %v416, 0.0
      %418 = vadd.xlane.f32.xlu0 %v417
      %v419 = vpop.xlane.xlu0 %418
      %v420 = vrcp.pop %v419
      %v421 = vmul.f32 %v416, %v420
      %422 = vrot.lane.b32.xlu0 %v329, 56
      %v423 = vpop.permute.xlu0 %422
      %v426 = vsel %vm158, %v421, 0
      %428 = vmatprep.subr.mxu0 0.0
      %429 = vmatpush1.msra.mxu0 %v423
      %430 = vmatprep.subr.mxu0 0.0
      %431 = vmatpush1.msra.mxu0 0.0
      %432 = vmatprep.subr.mxu0 0.0
      %433 = vmatpush1.msra.mxu0 0.0
      %434 = vmatprep.subr.mxu0 0.0
      %435 = vmatpush1.msra.mxu0 0.0
      %436 = vmatprep.subr.mxu0 0.0
      %437 = vmatpush1.msra.mxu0 0.0
      %438 = vmatprep.subr.mxu0 0.0
      %439 = vmatpush1.msra.mxu0 0.0
      %440 = vmatprep.subr.mxu0 0.0
      %441 = vmatpush1.msra.mxu0 0.0
      %442 = vmatprep.subr.mxu0 0.0
      %443 = vmatpush1.msra.mxu0 0.0
      %444 = vmatprep.subr.mxu0 0.0
      %445 = vmatpush1.msra.mxu0 0.0
      %446 = vmatprep.subr.mxu0 0.0
      %447 = vmatpush1.msra.mxu0 0.0
      %448 = vmatprep.subr.mxu0 0.0
      %449 = vmatpush1.msra.mxu0 0.0
      %450 = vmatprep.subr.mxu0 0.0
      %451 = vmatpush1.msra.mxu0 0.0
      %452 = vmatprep.subr.mxu0 0.0
      %453 = vmatpush1.msra.mxu0 0.0
      %454 = vmatprep.subr.mxu0 0.0
      %455 = vmatpush1.msra.mxu0 0.0
      %456 = vmatprep.subr.mxu0 0.0
      %457 = vmatpush1.msra.mxu0 0.0
      %458 = vmatprep.subr.mxu0 0.0
      %459 = vmatpush1.msra.mxu0 0.0
      %460 = vmatprep.subr.mxu0 0.0
      %461 = vmatpush1.msra.mxu0 0.0
      %462 = vmatprep.subr.mxu0 0.0
      %463 = vmatpush1.msra.mxu0 0.0
      %464 = vmatprep.subr.mxu0 0.0
      %465 = vmatpush1.msra.mxu0 0.0
      %466 = vmatprep.subr.mxu0 0.0
      %467 = vmatpush1.msra.mxu0 0.0
      %468 = vmatprep.subr.mxu0 0.0
      %469 = vmatpush1.msra.mxu0 0.0
      %470 = vmatprep.subr.mxu0 0.0
      %471 = vmatpush1.msra.mxu0 0.0
      %472 = vmatprep.subr.mxu0 0.0
      %473 = vmatpush1.msra.mxu0 0.0
      %474 = vmatprep.subr.mxu0 0.0
      %475 = vmatpush1.msra.mxu0 0.0
      %476 = vmatprep.subr.mxu0 0.0
      %477 = vmatpush1.msra.mxu0 0.0
      %478 = vmatprep.subr.mxu0 0.0
      %479 = vmatpush1.msra.mxu0 0.0
      %480 = vmatprep.subr.mxu0 0.0
      %481 = vmatpush1.msra.mxu0 0.0
      %482 = vmatprep.subr.mxu0 0.0
      %483 = vmatpush1.msra.mxu0 0.0
      %484 = vmatprep.subr.mxu0 0.0
      %485 = vmatpush1.msra.mxu0 0.0
      %486 = vmatprep.subr.mxu0 0.0
      %487 = vmatpush1.msra.mxu0 0.0
      %488 = vmatprep.subr.mxu0 0.0
      %489 = vmatpush1.msra.mxu0 0.0
      %490 = vmatprep.subr.mxu0 0.0
      %491 = vmatpush1.msra.mxu0 0.0
      %492 = vmatprep.mubr.f32.mxu0 0.0
      %493 = vmatmul.mubr.f32.gmra.mrb[0].mxu0 %v426
      %v494 = vpop.f32.mrb[0].mxu0
      %v495 = vadd.f32 0.0, %v494
      %v496 = vpop.f32.mrb[0].mxu0
      %497 = vdwg.mxu0
      %499 = vrot.lane.b32.xlu0 %v495, 8
      %v500 = vpop.permute.xlu0 %499
      %vm502 = vcmask 130112
      %503 = vst.msk [vmem:[%s152] sm:$0xff] %vm502, %v500
      %v504 = vld [vmem:[%s145] sm:$0xff]
      %506 = vrot.lane.b32.xlu0 %v504, 112
      %v507 = vpop.permute.xlu0 %506
      %508 = vrot.lane.b32.xlu0 %v504, 80
      %v509 = vpop.permute.xlu0 %508
      %v510 = vsel %vm158, %v507, 0
      %v512 = vsel %vm158, %v509, 0
      %514 = vmatprep.subr.mxu0 0.0
      %515 = vmatpush1.xpose.msra.mxu0 %v512
      %516 = vmatprep.subr.mxu0 0.0
      %517 = vmatpush1.xpose.msra.mxu0 0.0
      %518 = vmatprep.subr.mxu0 0.0
      %519 = vmatpush1.xpose.msra.mxu0 0.0
      %520 = vmatprep.subr.mxu0 0.0
      %521 = vmatpush1.xpose.msra.mxu0 0.0
      %522 = vmatprep.subr.mxu0 0.0
      %523 = vmatpush1.xpose.msra.mxu0 0.0
      %524 = vmatprep.subr.mxu0 0.0
      %525 = vmatpush1.xpose.msra.mxu0 0.0
      %526 = vmatprep.subr.mxu0 0.0
      %527 = vmatpush1.xpose.msra.mxu0 0.0
      %528 = vmatprep.subr.mxu0 0.0
      %529 = vmatpush1.xpose.msra.mxu0 0.0
      %530 = vmatprep.subr.mxu0 0.0
      %531 = vmatpush1.xpose.msra.mxu0 0.0
      %532 = vmatprep.subr.mxu0 0.0
      %533 = vmatpush1.xpose.msra.mxu0 0.0
      %534 = vmatprep.subr.mxu0 0.0
      %535 = vmatpush1.xpose.msra.mxu0 0.0
      %536 = vmatprep.subr.mxu0 0.0
      %537 = vmatpush1.xpose.msra.mxu0 0.0
      %538 = vmatprep.subr.mxu0 0.0
      %539 = vmatpush1.xpose.msra.mxu0 0.0
      %540 = vmatprep.subr.mxu0 0.0
      %541 = vmatpush1.xpose.msra.mxu0 0.0
      %542 = vmatprep.subr.mxu0 0.0
      %543 = vmatpush1.xpose.msra.mxu0 0.0
      %544 = vmatprep.subr.mxu0 0.0
      %545 = vmatpush1.xpose.msra.mxu0 0.0
      %546 = vmatprep.subr.mxu0 0.0
      %547 = vmatpush1.xpose.msra.mxu0 0.0
      %548 = vmatprep.subr.mxu0 0.0
      %549 = vmatpush1.xpose.msra.mxu0 0.0
      %550 = vmatprep.subr.mxu0 0.0
      %551 = vmatpush1.xpose.msra.mxu0 0.0
      %552 = vmatprep.subr.mxu0 0.0
      %553 = vmatpush1.xpose.msra.mxu0 0.0
      %554 = vmatprep.subr.mxu0 0.0
      %555 = vmatpush1.xpose.msra.mxu0 0.0
      %556 = vmatprep.subr.mxu0 0.0
      %557 = vmatpush1.xpose.msra.mxu0 0.0
      %558 = vmatprep.subr.mxu0 0.0
      %559 = vmatpush1.xpose.msra.mxu0 0.0
      %560 = vmatprep.subr.mxu0 0.0
      %561 = vmatpush1.xpose.msra.mxu0 0.0
      %562 = vmatprep.subr.mxu0 0.0
      %563 = vmatpush1.xpose.msra.mxu0 0.0
      %564 = vmatprep.subr.mxu0 0.0
      %565 = vmatpush1.xpose.msra.mxu0 0.0
      %566 = vmatprep.subr.mxu0 0.0
      %567 = vmatpush1.xpose.msra.mxu0 0.0
      %568 = vmatprep.subr.mxu0 0.0
      %569 = vmatpush1.xpose.msra.mxu0 0.0
      %570 = vmatprep.subr.mxu0 0.0
      %571 = vmatpush1.xpose.msra.mxu0 0.0
      %572 = vmatprep.subr.mxu0 0.0
      %573 = vmatpush1.xpose.msra.mxu0 0.0
      %574 = vmatprep.subr.mxu0 0.0
      %575 = vmatpush1.xpose.msra.mxu0 0.0
      %576 = vmatprep.subr.mxu0 0.0
      %577 = vmatpush1.xpose.msra.mxu0 0.0
      %578 = vmatprep.mubr.f32.mxu0 0.0
      %579 = vmatmul.mubr.f32.gmra.mrb[0].mxu0 %v510
      %v580 = vpop.f32.mrb[0].mxu0
      %v581 = vadd.f32 0.0, %v580
      %v582 = vpop.f32.mrb[0].mxu0
      %583 = vdwg.mxu0
      %v584 = vmul.f32 %v581, 0.35355338
      %v585 = vadd.f32 %v584, %v238
      %v586 = vsel %vm158, %v585, -inf
      %587 = vmax.xlane.f32.xlu0 %v586
      %v588 = vpop.xlane.xlu0 %587
      %v589 = vsub.f32 %v585, %v588
      %v590 = vmul.f32 %v589, 1.442695
      %v591 = vpow.pop %v590
      %v592 = vsel %vm158, %v591, 0.0
      %593 = vadd.xlane.f32.xlu0 %v592
      %v594 = vpop.xlane.xlu0 %593
      %v595 = vrcp.pop %v594
      %v596 = vmul.f32 %v591, %v595
      %597 = vrot.lane.b32.xlu0 %v504, 48
      %v598 = vpop.permute.xlu0 %597
      %v601 = vsel %vm158, %v596, 0
      %603 = vmatprep.subr.mxu0 0.0
      %604 = vmatpush1.msra.mxu0 %v598
      %605 = vmatprep.subr.mxu0 0.0
      %606 = vmatpush1.msra.mxu0 0.0
      %607 = vmatprep.subr.mxu0 0.0
      %608 = vmatpush1.msra.mxu0 0.0
      %609 = vmatprep.subr.mxu0 0.0
      %610 = vmatpush1.msra.mxu0 0.0
      %611 = vmatprep.subr.mxu0 0.0
      %612 = vmatpush1.msra.mxu0 0.0
      %613 = vmatprep.subr.mxu0 0.0
      %614 = vmatpush1.msra.mxu0 0.0
      %615 = vmatprep.subr.mxu0 0.0
      %616 = vmatpush1.msra.mxu0 0.0
      %617 = vmatprep.subr.mxu0 0.0
      %618 = vmatpush1.msra.mxu0 0.0
      %619 = vmatprep.subr.mxu0 0.0
      %620 = vmatpush1.msra.mxu0 0.0
      %621 = vmatprep.subr.mxu0 0.0
      %622 = vmatpush1.msra.mxu0 0.0
      %623 = vmatprep.subr.mxu0 0.0
      %624 = vmatpush1.msra.mxu0 0.0
      %625 = vmatprep.subr.mxu0 0.0
      %626 = vmatpush1.msra.mxu0 0.0
      %627 = vmatprep.subr.mxu0 0.0
      %628 = vmatpush1.msra.mxu0 0.0
      %629 = vmatprep.subr.mxu0 0.0
      %630 = vmatpush1.msra.mxu0 0.0
      %631 = vmatprep.subr.mxu0 0.0
      %632 = vmatpush1.msra.mxu0 0.0
      %633 = vmatprep.subr.mxu0 0.0
      %634 = vmatpush1.msra.mxu0 0.0
      %635 = vmatprep.subr.mxu0 0.0
      %636 = vmatpush1.msra.mxu0 0.0
      %637 = vmatprep.subr.mxu0 0.0
      %638 = vmatpush1.msra.mxu0 0.0
      %639 = vmatprep.subr.mxu0 0.0
      %640 = vmatpush1.msra.mxu0 0.0
      %641 = vmatprep.subr.mxu0 0.0
      %642 = vmatpush1.msra.mxu0 0.0
      %643 = vmatprep.subr.mxu0 0.0
      %644 = vmatpush1.msra.mxu0 0.0
      %645 = vmatprep.subr.mxu0 0.0
      %646 = vmatpush1.msra.mxu0 0.0
      %647 = vmatprep.subr.mxu0 0.0
      %648 = vmatpush1.msra.mxu0 0.0
      %649 = vmatprep.subr.mxu0 0.0
      %650 = vmatpush1.msra.mxu0 0.0
      %651 = vmatprep.subr.mxu0 0.0
      %652 = vmatpush1.msra.mxu0 0.0
      %653 = vmatprep.subr.mxu0 0.0
      %654 = vmatpush1.msra.mxu0 0.0
      %655 = vmatprep.subr.mxu0 0.0
      %656 = vmatpush1.msra.mxu0 0.0
      %657 = vmatprep.subr.mxu0 0.0
      %658 = vmatpush1.msra.mxu0 0.0
      %659 = vmatprep.subr.mxu0 0.0
      %660 = vmatpush1.msra.mxu0 0.0
      %661 = vmatprep.subr.mxu0 0.0
      %662 = vmatpush1.msra.mxu0 0.0
      %663 = vmatprep.subr.mxu0 0.0
      %664 = vmatpush1.msra.mxu0 0.0
      %665 = vmatprep.subr.mxu0 0.0
      %666 = vmatpush1.msra.mxu0 0.0
      %667 = vmatprep.mubr.f32.mxu0 0.0
      %668 = vmatmul.mubr.f32.gmra.mrb[0].mxu0 %v601
      %v669 = vpop.f32.mrb[0].mxu0
      %v670 = vadd.f32 0.0, %v669
      %v671 = vpop.f32.mrb[0].mxu0
      %672 = vdwg.mxu0
      %674 = vrot.lane.b32.xlu0 %v670, 16
      %v675 = vpop.permute.xlu0 %674
      %vm677 = vcmask 195712
      %678 = vst.msk [vmem:[%s152] sm:$0xff] %vm677, %v675
      %v679 = vld [vmem:[%s145] sm:$0xff]
      %681 = vrot.lane.b32.xlu0 %v679, 104
      %v682 = vpop.permute.xlu0 %681
      %683 = vrot.lane.b32.xlu0 %v679, 72
      %v684 = vpop.permute.xlu0 %683
      %v685 = vsel %vm158, %v682, 0
      %v687 = vsel %vm158, %v684, 0
      %689 = vmatprep.subr.mxu0 0.0
      %690 = vmatpush1.xpose.msra.mxu0 %v687
      %691 = vmatprep.subr.mxu0 0.0
      %692 = vmatpush1.xpose.msra.mxu0 0.0
      %693 = vmatprep.subr.mxu0 0.0
      %694 = vmatpush1.xpose.msra.mxu0 0.0
      %695 = vmatprep.subr.mxu0 0.0
      %696 = vmatpush1.xpose.msra.mxu0 0.0
      %697 = vmatprep.subr.mxu0 0.0
      %698 = vmatpush1.xpose.msra.mxu0 0.0
      %699 = vmatprep.subr.mxu0 0.0
      %700 = vmatpush1.xpose.msra.mxu0 0.0
      %701 = vmatprep.subr.mxu0 0.0
      %702 = vmatpush1.xpose.msra.mxu0 0.0
      %703 = vmatprep.subr.mxu0 0.0
      %704 = vmatpush1.xpose.msra.mxu0 0.0
      %705 = vmatprep.subr.mxu0 0.0
      %706 = vmatpush1.xpose.msra.mxu0 0.0
      %707 = vmatprep.subr.mxu0 0.0
      %708 = vmatpush1.xpose.msra.mxu0 0.0
      %709 = vmatprep.subr.mxu0 0.0
      %710 = vmatpush1.xpose.msra.mxu0 0.0
      %711 = vmatprep.subr.mxu0 0.0
      %712 = vmatpush1.xpose.msra.mxu0 0.0
      %713 = vmatprep.subr.mxu0 0.0
      %714 = vmatpush1.xpose.msra.mxu0 0.0
      %715 = vmatprep.subr.mxu0 0.0
      %716 = vmatpush1.xpose.msra.mxu0 0.0
      %717 = vmatprep.subr.mxu0 0.0
      %718 = vmatpush1.xpose.msra.mxu0 0.0
      %719 = vmatprep.subr.mxu0 0.0
      %720 = vmatpush1.xpose.msra.mxu0 0.0
      %721 = vmatprep.subr.mxu0 0.0
      %722 = vmatpush1.xpose.msra.mxu0 0.0
      %723 = vmatprep.subr.mxu0 0.0
      %724 = vmatpush1.xpose.msra.mxu0 0.0
      %725 = vmatprep.subr.mxu0 0.0
      %726 = vmatpush1.xpose.msra.mxu0 0.0
      %727 = vmatprep.subr.mxu0 0.0
      %728 = vmatpush1.xpose.msra.mxu0 0.0
      %729 = vmatprep.subr.mxu0 0.0
      %730 = vmatpush1.xpose.msra.mxu0 0.0
      %731 = vmatprep.subr.mxu0 0.0
      %732 = vmatpush1.xpose.msra.mxu0 0.0
      %733 = vmatprep.subr.mxu0 0.0
      %734 = vmatpush1.xpose.msra.mxu0 0.0
      %735 = vmatprep.subr.mxu0 0.0
      %736 = vmatpush1.xpose.msra.mxu0 0.0
      %737 = vmatprep.subr.mxu0 0.0
      %738 = vmatpush1.xpose.msra.mxu0 0.0
      %739 = vmatprep.subr.mxu0 0.0
      %740 = vmatpush1.xpose.msra.mxu0 0.0
      %741 = vmatprep.subr.mxu0 0.0
      %742 = vmatpush1.xpose.msra.mxu0 0.0
      %743 = vmatprep.subr.mxu0 0.0
      %744 = vmatpush1.xpose.msra.mxu0 0.0
      %745 = vmatprep.subr.mxu0 0.0
      %746 = vmatpush1.xpose.msra.mxu0 0.0
      %747 = vmatprep.subr.mxu0 0.0
      %748 = vmatpush1.xpose.msra.mxu0 0.0
      %749 = vmatprep.subr.mxu0 0.0
      %750 = vmatpush1.xpose.msra.mxu0 0.0
      %751 = vmatprep.subr.mxu0 0.0
      %752 = vmatpush1.xpose.msra.mxu0 0.0
      %753 = vmatprep.mubr.f32.mxu0 0.0
      %754 = vmatmul.mubr.f32.gmra.mrb[0].mxu0 %v685
      %v755 = vpop.f32.mrb[0].mxu0
      %v756 = vadd.f32 0.0, %v755
      %v757 = vpop.f32.mrb[0].mxu0
      %758 = vdwg.mxu0
      %v759 = vmul.f32 %v756, 0.35355338
      %v760 = vadd.f32 %v759, %v238
      %v761 = vsel %vm158, %v760, -inf
      %762 = vmax.xlane.f32.xlu0 %v761
      %v763 = vpop.xlane.xlu0 %762
      %v764 = vsub.f32 %v760, %v763
      %v765 = vmul.f32 %v764, 1.442695
      %v766 = vpow.pop %v765
      %v767 = vsel %vm158, %v766, 0.0
      %768 = vadd.xlane.f32.xlu0 %v767
      %v769 = vpop.xlane.xlu0 %768
      %v770 = vrcp.pop %v769
      %v771 = vmul.f32 %v766, %v770
      %772 = vrot.lane.b32.xlu0 %v679, 40
      %v773 = vpop.permute.xlu0 %772
      %v776 = vsel %vm158, %v771, 0
      %778 = vmatprep.subr.mxu0 0.0
      %779 = vmatpush1.msra.mxu0 %v773
      %780 = vmatprep.subr.mxu0 0.0
      %781 = vmatpush1.msra.mxu0 0.0
      %782 = vmatprep.subr.mxu0 0.0
      %783 = vmatpush1.msra.mxu0 0.0
      %784 = vmatprep.subr.mxu0 0.0
      %785 = vmatpush1.msra.mxu0 0.0
      %786 = vmatprep.subr.mxu0 0.0
      %787 = vmatpush1.msra.mxu0 0.0
      %788 = vmatprep.subr.mxu0 0.0
      %789 = vmatpush1.msra.mxu0 0.0
      %790 = vmatprep.subr.mxu0 0.0
      %791 = vmatpush1.msra.mxu0 0.0
      %792 = vmatprep.subr.mxu0 0.0
      %793 = vmatpush1.msra.mxu0 0.0
      %794 = vmatprep.subr.mxu0 0.0
      %795 = vmatpush1.msra.mxu0 0.0
      %796 = vmatprep.subr.mxu0 0.0
      %797 = vmatpush1.msra.mxu0 0.0
      %798 = vmatprep.subr.mxu0 0.0
      %799 = vmatpush1.msra.mxu0 0.0
      %800 = vmatprep.subr.mxu0 0.0
      %801 = vmatpush1.msra.mxu0 0.0
      %802 = vmatprep.subr.mxu0 0.0
      %803 = vmatpush1.msra.mxu0 0.0
      %804 = vmatprep.subr.mxu0 0.0
      %805 = vmatpush1.msra.mxu0 0.0
      %806 = vmatprep.subr.mxu0 0.0
      %807 = vmatpush1.msra.mxu0 0.0
      %808 = vmatprep.subr.mxu0 0.0
      %809 = vmatpush1.msra.mxu0 0.0
      %810 = vmatprep.subr.mxu0 0.0
      %811 = vmatpush1.msra.mxu0 0.0
      %812 = vmatprep.subr.mxu0 0.0
      %813 = vmatpush1.msra.mxu0 0.0
      %814 = vmatprep.subr.mxu0 0.0
      %815 = vmatpush1.msra.mxu0 0.0
      %816 = vmatprep.subr.mxu0 0.0
      %817 = vmatpush1.msra.mxu0 0.0
      %818 = vmatprep.subr.mxu0 0.0
      %819 = vmatpush1.msra.mxu0 0.0
      %820 = vmatprep.subr.mxu0 0.0
      %821 = vmatpush1.msra.mxu0 0.0
      %822 = vmatprep.subr.mxu0 0.0
      %823 = vmatpush1.msra.mxu0 0.0
      %824 = vmatprep.subr.mxu0 0.0
      %825 = vmatpush1.msra.mxu0 0.0
      %826 = vmatprep.subr.mxu0 0.0
      %827 = vmatpush1.msra.mxu0 0.0
      %828 = vmatprep.subr.mxu0 0.0
      %829 = vmatpush1.msra.mxu0 0.0
      %830 = vmatprep.subr.mxu0 0.0
      %831 = vmatpush1.msra.mxu0 0.0
      %832 = vmatprep.subr.mxu0 0.0
      %833 = vmatpush1.msra.mxu0 0.0
      %834 = vmatprep.subr.mxu0 0.0
      %835 = vmatpush1.msra.mxu0 0.0
      %836 = vmatprep.subr.mxu0 0.0
      %837 = vmatpush1.msra.mxu0 0.0
      %838 = vmatprep.subr.mxu0 0.0
      %839 = vmatpush1.msra.mxu0 0.0
      %840 = vmatprep.subr.mxu0 0.0
      %841 = vmatpush1.msra.mxu0 0.0
      %842 = vmatprep.mubr.f32.mxu0 0.0
      %843 = vmatmul.mubr.f32.gmra.mrb[0].mxu0 %v776
      %v844 = vpop.f32.mrb[0].mxu0
      %v845 = vadd.f32 0.0, %v844
      %v846 = vpop.f32.mrb[0].mxu0
      %847 = vdwg.mxu0
      %849 = vrot.lane.b32.xlu0 %v845, 24
      %v850 = vpop.permute.xlu0 %849
      %vm852 = vcmask 261312
      %853 = vst.msk [vmem:[%s152] sm:$0xff] %vm852, %v850
      %p854 = scmp.lt.s32.totalorder %s13, 1
      %s855 = scalar_select %p854, %s13, 1
      %s856 = smul.addr %s855, 8
      %s857 = scalar_lea.vmem %s2, %s856
      // Predicated region
      $region29: #{transformer_model_forward.13} parent=27 // pred_check
        %p858 = pneg %p83
      $region30: #{transformer_model_forward.13} parent=27 // pred_check_branch
        %860 = sbr.rel (%p858) target = $region32
      $region31: #{transformer_model_forward.13} parent=27 // pred_region
        _
      $region32: #{transformer_model_forward.13} parent=27 // pred_fallthru
        _
    $region28: #{transformer_model_forward.13} parent=5 // pred_fallthru
      _
    %p861 = scmp.le.s32.totalorder 2, %s8
    // Predicated region
    $region33: #{transformer_model_forward.13} parent=5 // pred_check
      %p862 = pneg %p861
    $region34: #{transformer_model_forward.13} parent=5 // pred_check_branch
      %864 = sbr.rel (%p862) target = $region36
    $region35: #{transformer_model_forward.13} parent=5 // pred_region
      %s865 = ssub.s32 %s8, 2
      // Predicated region
      $region37: #{transformer_model_forward.13} parent=35 // pred_check
        %p866 = pneg %p89
      $region38: #{transformer_model_forward.13} parent=35 // pred_check_branch
        %868 = sbr.rel (%p866) target = $region40
      $region39: #{transformer_model_forward.13} parent=35 // pred_region
        %p869 = scmp.lt.s32.totalorder %s14, 1
        %s870 = scalar_select %p869, %s14, 1
        %s871 = smul.addr %s870, 8
        %s872 = scalar_lea.vmem %s2, %s871
      $region40: #{transformer_model_forward.13} parent=35 // pred_fallthru
        _
    $region36: #{transformer_model_forward.13} parent=5 // pred_fallthru
      _
  $region6: #{transformer_model_forward.13} parent=0 // loop_footer
    %s12 = sadd.s32 1, %s8
  $region7: #{transformer_model_forward.13} parent=0 // loop_footer_branch
    %7 = sbr.rel target = $region3
  $region8: #{transformer_model_forward.13} parent=0 // loop_exit
    _

// kernel: transformer_model_forward.11
$region0: #{transformer_model_forward.11}
  #allocation0 [shape = 'u32[]', space=smem, size = 0x4, offset = 0x4, fixed_abs, tag = 'smem constant byte address 0x4 - core index']
  #allocation1 [shape = 'u32[144,128]{1,0:T(1,128)}', space=vmem, size = 0x12000, scoped, tag = 'internal scratch']
  #allocation2 [shape = 'f32[16,32]{1,0:T(8,128)}', space=vmem, size = 0x2000, scoped, tag = 'scratch operand']
  %s0 = inlined_call_operand.vmem [shape: f32[16,16], index: 0, kind: input, shape index: {}]
  %s1 = inlined_call_operand.vmem [shape: f32[16,32], index: 1, kind: input, shape index: {}]
  %s2 = inlined_call_operand.vmem [shape: f32[1,32], index: 2, kind: input, shape index: {}]
  %s3 = inlined_call_operand.vmem [shape: f32[16,32], index: 3, kind: input, shape index: {}]
  %s4 = inlined_call_operand.vmem [shape: f32[1,32], index: 4, kind: input, shape index: {}]
  %s5 = inlined_call_operand.vmem [shape: f32[1,32], index: 5, kind: input, shape index: {}]
  %s6 = inlined_call_operand.vmem [shape: f32[16,32], index: 6, kind: output, shape index: {}]
  %s7 = sld [smem:[#allocation0]]
  $region42: #{transformer_model_forward.11} parent=0
    _
  %s9 = ssub.s32 1, %s7
  %s10 = scalar_select 0, %s9, %s7
  // Predicated region
  $region2: #{transformer_model_forward.11} parent=0 // pred_check
    _
  $region3: #{transformer_model_forward.11} parent=0 // pred_check_branch
    %12 = sbr.rel (0) target = $region5
  $region4: #{transformer_model_forward.11} parent=0 // pred_region
    _
  $region5: #{transformer_model_forward.11} parent=0 // pred_fallthru
    _
  // Predicated region
  $region6: #{transformer_model_forward.11} parent=0 // pred_check
    _
  $region7: #{transformer_model_forward.11} parent=0 // pred_check_branch
    %14 = sbr.rel (0) target = $region9
  $region8: #{transformer_model_forward.11} parent=0 // pred_region
    _
  $region9: #{transformer_model_forward.11} parent=0 // pred_fallthru
    _
  // Predicated region
  $region10: #{transformer_model_forward.11} parent=0 // pred_check
    _
  $region11: #{transformer_model_forward.11} parent=0 // pred_check_branch
    %16 = sbr.rel (0) target = $region13
  $region12: #{transformer_model_forward.11} parent=0 // pred_region
    _
  $region13: #{transformer_model_forward.11} parent=0 // pred_fallthru
    _
  // Predicated region
  $region14: #{transformer_model_forward.11} parent=0 // pred_check
    _
  $region15: #{transformer_model_forward.11} parent=0 // pred_check_branch
    %18 = sbr.rel (0) target = $region17
  $region16: #{transformer_model_forward.11} parent=0 // pred_region
    _
  $region17: #{transformer_model_forward.11} parent=0 // pred_fallthru
    _
  // Predicated region
  $region18: #{transformer_model_forward.11} parent=0 // pred_check
    _
  $region19: #{transformer_model_forward.11} parent=0 // pred_check_branch
    %20 = sbr.rel (0) target = $region21
  $region20: #{transformer_model_forward.11} parent=0 // pred_region
    _
  $region21: #{transformer_model_forward.11} parent=0 // pred_fallthru
    _
  // Predicated region
  $region22: #{transformer_model_forward.11} parent=0 // pred_check
    _
  $region23: #{transformer_model_forward.11} parent=0 // pred_check_branch
    %22 = sbr.rel (0) target = $region25
  $region24: #{transformer_model_forward.11} parent=0 // pred_region
    _
  $region25: #{transformer_model_forward.11} parent=0 // pred_fallthru
    _
  %p23 = scmp.eq.s32.totalorder 0, 0
  // Predicated region
  $region26: #{transformer_model_forward.11} parent=0 // pred_check
    %p24 = pneg %p23
  $region27: #{transformer_model_forward.11} parent=0 // pred_check_branch
    %26 = sbr.rel (%p24) target = $region29
  $region28: #{transformer_model_forward.11} parent=0 // pred_region
    %vm27 = vcmask 261120
    %28 = vst.msk [vmem:[#allocation2] sm:$0xff] %vm27, 0.0
    %29 = vst.msk [vmem:[#allocation2 + $0x8] sm:$0xff] %vm27, 0.0
  $region29: #{transformer_model_forward.11} parent=0 // pred_fallthru
    _
  %v30 = vld [vmem:[#allocation2] sm:$0xff]
  %v31 = vld [vmem:[#allocation2 + $0x8] sm:$0xff]
  %v32 = vld [vmem:[%s0] sm:$0xff]
  %v33 = vld [vmem:[%s0 + $0x8] sm:$0xff]
  %v34 = vld [vmem:[%s1] sm:$0xff]
  %v35 = vld [vmem:[%s1 + $0x8] sm:$0xff]
  %vm36 = vcmask 130048
  %v38 = vsel %vm36, %v32, 0
  %v41 = vsel %vm36, %v33, 0
  %43 = vmatprep.subr.mxu0 0.0
  %44 = vmatpush1.msra.mxu0 %v34
  %45 = vmatprep.subr.mxu0 0.0
  %46 = vmatpush1.msra.mxu0 %v35
  %47 = vmatprep.subr.mxu0 0.0
  %48 = vmatpush1.msra.mxu0 0.0
  %49 = vmatprep.subr.mxu0 0.0
  %50 = vmatpush1.msra.mxu0 0.0
  %51 = vmatprep.subr.mxu0 0.0
  %52 = vmatpush1.msra.mxu0 0.0
  %53 = vmatprep.subr.mxu0 0.0
  %54 = vmatpush1.msra.mxu0 0.0
  %55 = vmatprep.subr.mxu0 0.0
  %56 = vmatpush1.msra.mxu0 0.0
  %57 = vmatprep.subr.mxu0 0.0
  %58 = vmatpush1.msra.mxu0 0.0
  %59 = vmatprep.subr.mxu0 0.0
  %60 = vmatpush1.msra.mxu0 0.0
  %61 = vmatprep.subr.mxu0 0.0
  %62 = vmatpush1.msra.mxu0 0.0
  %63 = vmatprep.subr.mxu0 0.0
  %64 = vmatpush1.msra.mxu0 0.0
  %65 = vmatprep.subr.mxu0 0.0
  %66 = vmatpush1.msra.mxu0 0.0
  %67 = vmatprep.subr.mxu0 0.0
  %68 = vmatpush1.msra.mxu0 0.0
  %69 = vmatprep.subr.mxu0 0.0
  %70 = vmatpush1.msra.mxu0 0.0
  %71 = vmatprep.subr.mxu0 0.0
  %72 = vmatpush1.msra.mxu0 0.0
  %73 = vmatprep.subr.mxu0 0.0
  %74 = vmatpush1.msra.mxu0 0.0
  %75 = vmatprep.subr.mxu0 0.0
  %76 = vmatpush1.msra.mxu0 0.0
  %77 = vmatprep.subr.mxu0 0.0
  %78 = vmatpush1.msra.mxu0 0.0
  %79 = vmatprep.subr.mxu0 0.0
  %80 = vmatpush1.msra.mxu0 0.0
  %81 = vmatprep.subr.mxu0 0.0
  %82 = vmatpush1.msra.mxu0 0.0
  %83 = vmatprep.subr.mxu0 0.0
  %84 = vmatpush1.msra.mxu0 0.0
  %85 = vmatprep.subr.mxu0 0.0
  %86 = vmatpush1.msra.mxu0 0.0
  %87 = vmatprep.subr.mxu0 0.0
  %88 = vmatpush1.msra.mxu0 0.0
  %89 = vmatprep.subr.mxu0 0.0
  %90 = vmatpush1.msra.mxu0 0.0
  %91 = vmatprep.subr.mxu0 0.0
  %92 = vmatpush1.msra.mxu0 0.0
  %93 = vmatprep.subr.mxu0 0.0
  %94 = vmatpush1.msra.mxu0 0.0
  %95 = vmatprep.subr.mxu0 0.0
  %96 = vmatpush1.msra.mxu0 0.0
  %97 = vmatprep.subr.mxu0 0.0
  %98 = vmatpush1.msra.mxu0 0.0
  %99 = vmatprep.subr.mxu0 0.0
  %100 = vmatpush1.msra.mxu0 0.0
  %101 = vmatprep.subr.mxu0 0.0
  %102 = vmatpush1.msra.mxu0 0.0
  %103 = vmatprep.subr.mxu0 0.0
  %104 = vmatpush1.msra.mxu0 0.0
  %105 = vmatprep.subr.mxu0 0.0
  %106 = vmatpush1.msra.mxu0 0.0
  %107 = vmatprep.mubr.f32.mxu0 0.0
  %108 = vmatmul.mubr.f32.gmra.mrb[0].mxu0 %v38
  %v109 = vpop.f32.mrb[0].mxu0
  %v110 = vadd.f32 0.0, %v109
  %v111 = vpop.f32.mrb[0].mxu0
  %112 = vmatprep.mubr.f32.mxu0 0.0
  %113 = vmatmul.mubr.f32.gmra.mrb[0].mxu0 %v41
  %v114 = vpop.f32.mrb[0].mxu0
  %v115 = vadd.f32 0.0, %v114
  %v116 = vpop.f32.mrb[0].mxu0
  %117 = vdwg.mxu0
  %v118 = vadd.f32 %v30, %v110
  %v119 = vadd.f32 %v31, %v115
  %vm120 = vcmask 261120
  %121 = vst.msk [vmem:[#allocation2] sm:$0xff] %vm120, %v118
  %122 = vst.msk [vmem:[#allocation2 + $0x8] sm:$0xff] %vm120, %v119
  // Predicated region
  $region30: #{transformer_model_forward.11} parent=0 // pred_check
    %p123 = pneg %p23
  $region31: #{transformer_model_forward.11} parent=0 // pred_check_branch
    %125 = sbr.rel (%p123) target = $region33
  $region32: #{transformer_model_forward.11} parent=0 // pred_region
    %v126 = vld [vmem:[#allocation2] sm:$0xff]
    %v127 = vld [vmem:[#allocation2 + $0x8] sm:$0xff]
    %v128 = vld [vmem:[%s2] sm:$0x1]
    %v130 = vlaneseq
    %v131 = vshrl.u32 %v130, 7
    %v132 = vsub.s32 0, %v131
    %v133 = vrot.slane %v128, %v132
    %v135 = vadd.f32 %v126, %v133
    %v136 = vadd.f32 %v127, %v133
    %v137 = vld [vmem:[%s3] sm:$0xff]
    %v138 = vld [vmem:[%s3 + $0x8] sm:$0xff]
    %v139 = vadd.f32 %v135, %v137
    %v140 = vadd.f32 %v136, %v138
    %v141 = vsel %vm120, %v139, 0.0
    %142 = vadd.xlane.f32.xlu0 %v141
    %v143 = vpop.xlane.xlu0 %142
    %v144 = vsel %vm120, %v140, 0.0
    %145 = vadd.xlane.f32.xlu0 %v144
    %v146 = vpop.xlane.xlu0 %145
    %v147 = vrcp.pop 32.0
    %v148 = vmul.f32 %v143, %v147
    %v149 = vmul.f32 %v146, %v147
    %v150 = vsub.f32 %v139, %v148
    %v151 = vsub.f32 %v140, %v149
    %v152 = vmul.f32 %v150, %v150
    %v153 = vmul.f32 %v151, %v151
    %v154 = vsel %vm120, %v152, 0.0
    %155 = vadd.xlane.f32.xlu0 %v154
    %v156 = vpop.xlane.xlu0 %155
    %v157 = vsel %vm120, %v153, 0.0
    %158 = vadd.xlane.f32.xlu0 %v157
    %v159 = vpop.xlane.xlu0 %158
    %v160 = vmul.f32 %v156, %v147
    %v161 = vmul.f32 %v159, %v147
    %v162 = vadd.f32 %v160, 1e-12
    %v163 = vadd.f32 %v161, 1e-12
    %v164 = vrsqrt.pop %v162
    %v165 = vmul.f32 %v162, %v164
    %vm166 = vcmp.eq.f32.partialorder %v162, inf
    %v167 = vsel %vm166, %v162, %v165
    %vm168 = vcmp.eq.f32.partialorder %v162, 0.0
    %v169 = vand.u32 %v162, 2147483648
    %v170 = vsel %vm168, %v169, %v167
    %v171 = vrsqrt.pop %v163
    %v172 = vmul.f32 %v163, %v171
    %vm173 = vcmp.eq.f32.partialorder %v163, inf
    %v174 = vsel %vm173, %v163, %v172
    %vm175 = vcmp.eq.f32.partialorder %v163, 0.0
    %v176 = vand.u32 %v163, 2147483648
    %v177 = vsel %vm175, %v176, %v174
    %v178 = vrcp.pop %v170
    %v179 = vmul.f32 %v150, %v178
    %v180 = vrcp.pop %v177
    %v181 = vmul.f32 %v151, %v180
    %v182 = vld [vmem:[%s4] sm:$0x1]
    %v184 = vlaneseq
    %v185 = vshrl.u32 %v184, 7
    %v186 = vsub.s32 0, %v185
    %v187 = vrot.slane %v182, %v186
    %v189 = vmul.f32 %v187, %v179
    %v190 = vmul.f32 %v187, %v181
    %v191 = vld [vmem:[%s5] sm:$0x1]
    %v193 = vlaneseq
    %v194 = vshrl.u32 %v193, 7
    %v195 = vsub.s32 0, %v194
    %v196 = vrot.slane %v191, %v195
    %v198 = vadd.f32 %v189, %v196
    %v199 = vadd.f32 %v190, %v196
    %200 = vst.msk [vmem:[%s6] sm:$0xff] %vm120, %v198
    %201 = vst.msk [vmem:[%s6 + $0x8] sm:$0xff] %vm120, %v199
  $region33: #{transformer_model_forward.11} parent=0 // pred_fallthru
    _
  // Predicated region
  $region34: #{transformer_model_forward.11} parent=0 // pred_check
    _
  $region35: #{transformer_model_forward.11} parent=0 // pred_check_branch
    %203 = sbr.rel (0) target = $region37
  $region36: #{transformer_model_forward.11} parent=0 // pred_region
    _
  $region37: #{transformer_model_forward.11} parent=0 // pred_fallthru
    _
  // Predicated region
  $region38: #{transformer_model_forward.11} parent=0 // pred_check
    _
  $region39: #{transformer_model_forward.11} parent=0 // pred_check_branch
    %205 = sbr.rel (0) target = $region41
  $region40: #{transformer_model_forward.11} parent=0 // pred_region
    _
  $region41: #{transformer_model_forward.11} parent=0 // pred_fallthru
    _

// kernel: transformer_model_forward.14
$region0: #{transformer_model_forward.14}
  #allocation0 [shape = 'u32[]', space=smem, size = 0x4, offset = 0x4, fixed_abs, tag = 'smem constant byte address 0x4 - core index']
  #allocation1 [shape = 'u32[144,128]{1,0:T(1,128)}', space=vmem, size = 0x12000, scoped, tag = 'internal scratch']
  #allocation2 [shape = 'f32[16,32]{1,0:T(8,128)}', space=vmem, size = 0x2000, scoped, tag = 'scratch operand']
  %s0 = inlined_call_operand.vmem [shape: f32[16,32], index: 0, kind: input, shape index: {}]
  %s1 = inlined_call_operand.vmem [shape: f32[32,32], index: 1, kind: input, shape index: {}]
  %s2 = inlined_call_operand.vmem [shape: f32[1,32], index: 2, kind: input, shape index: {}]
  %s3 = inlined_call_operand.vmem [shape: f32[16,32], index: 3, kind: input, shape index: {}]
  %s4 = inlined_call_operand.vmem [shape: f32[1,32], index: 4, kind: input, shape index: {}]
  %s5 = inlined_call_operand.vmem [shape: f32[1,32], index: 5, kind: input, shape index: {}]
  %s6 = inlined_call_operand.vmem [shape: f32[16,32], index: 6, kind: output, shape index: {}]
  %s7 = sld [smem:[#allocation0]]
  $region42: #{transformer_model_forward.14} parent=0
    _
  %s9 = ssub.s32 1, %s7
  %s10 = scalar_select 0, %s9, %s7
  // Predicated region
  $region2: #{transformer_model_forward.14} parent=0 // pred_check
    _
  $region3: #{transformer_model_forward.14} parent=0 // pred_check_branch
    %12 = sbr.rel (0) target = $region5
  $region4: #{transformer_model_forward.14} parent=0 // pred_region
    _
  $region5: #{transformer_model_forward.14} parent=0 // pred_fallthru
    _
  // Predicated region
  $region6: #{transformer_model_forward.14} parent=0 // pred_check
    _
  $region7: #{transformer_model_forward.14} parent=0 // pred_check_branch
    %14 = sbr.rel (0) target = $region9
  $region8: #{transformer_model_forward.14} parent=0 // pred_region
    _
  $region9: #{transformer_model_forward.14} parent=0 // pred_fallthru
    _
  // Predicated region
  $region10: #{transformer_model_forward.14} parent=0 // pred_check
    _
  $region11: #{transformer_model_forward.14} parent=0 // pred_check_branch
    %16 = sbr.rel (0) target = $region13
  $region12: #{transformer_model_forward.14} parent=0 // pred_region
    _
  $region13: #{transformer_model_forward.14} parent=0 // pred_fallthru
    _
  // Predicated region
  $region14: #{transformer_model_forward.14} parent=0 // pred_check
    _
  $region15: #{transformer_model_forward.14} parent=0 // pred_check_branch
    %18 = sbr.rel (0) target = $region17
  $region16: #{transformer_model_forward.14} parent=0 // pred_region
    _
  $region17: #{transformer_model_forward.14} parent=0 // pred_fallthru
    _
  // Predicated region
  $region18: #{transformer_model_forward.14} parent=0 // pred_check
    _
  $region19: #{transformer_model_forward.14} parent=0 // pred_check_branch
    %20 = sbr.rel (0) target = $region21
  $region20: #{transformer_model_forward.14} parent=0 // pred_region
    _
  $region21: #{transformer_model_forward.14} parent=0 // pred_fallthru
    _
  // Predicated region
  $region22: #{transformer_model_forward.14} parent=0 // pred_check
    _
  $region23: #{transformer_model_forward.14} parent=0 // pred_check_branch
    %22 = sbr.rel (0) target = $region25
  $region24: #{transformer_model_forward.14} parent=0 // pred_region
    _
  $region25: #{transformer_model_forward.14} parent=0 // pred_fallthru
    _
  %p23 = scmp.eq.s32.totalorder 0, 0
  // Predicated region
  $region26: #{transformer_model_forward.14} parent=0 // pred_check
    %p24 = pneg %p23
  $region27: #{transformer_model_forward.14} parent=0 // pred_check_branch
    %26 = sbr.rel (%p24) target = $region29
  $region28: #{transformer_model_forward.14} parent=0 // pred_region
    %vm27 = vcmask 261120
    %28 = vst.msk [vmem:[#allocation2] sm:$0xff] %vm27, 0.0
    %29 = vst.msk [vmem:[#allocation2 + $0x8] sm:$0xff] %vm27, 0.0
  $region29: #{transformer_model_forward.14} parent=0 // pred_fallthru
    _
  %v30 = vld [vmem:[#allocation2] sm:$0xff]
  %v31 = vld [vmem:[#allocation2 + $0x8] sm:$0xff]
  %v32 = vld [vmem:[%s0] sm:$0xff]
  %v33 = vld [vmem:[%s0 + $0x8] sm:$0xff]
  %v34 = vld [vmem:[%s1] sm:$0xff]
  %v35 = vld [vmem:[%s1 + $0x8] sm:$0xff]
  %v36 = vld [vmem:[%s1 + $0x10] sm:$0xff]
  %v37 = vld [vmem:[%s1 + $0x18] sm:$0xff]
  %vm38 = vcmask 261120
  %v40 = vsel %vm38, %v32, 0
  %v43 = vsel %vm38, %v33, 0
  %45 = vmatprep.subr.mxu0 0.0
  %46 = vmatpush1.msra.mxu0 %v34
  %47 = vmatprep.subr.mxu0 0.0
  %48 = vmatpush1.msra.mxu0 %v35
  %49 = vmatprep.subr.mxu0 0.0
  %50 = vmatpush1.msra.mxu0 %v36
  %51 = vmatprep.subr.mxu0 0.0
  %52 = vmatpush1.msra.mxu0 %v37
  %53 = vmatprep.subr.mxu0 0.0
  %54 = vmatpush1.msra.mxu0 0.0
  %55 = vmatprep.subr.mxu0 0.0
  %56 = vmatpush1.msra.mxu0 0.0
  %57 = vmatprep.subr.mxu0 0.0
  %58 = vmatpush1.msra.mxu0 0.0
  %59 = vmatprep.subr.mxu0 0.0
  %60 = vmatpush1.msra.mxu0 0.0
  %61 = vmatprep.subr.mxu0 0.0
  %62 = vmatpush1.msra.mxu0 0.0
  %63 = vmatprep.subr.mxu0 0.0
  %64 = vmatpush1.msra.mxu0 0.0
  %65 = vmatprep.subr.mxu0 0.0
  %66 = vmatpush1.msra.mxu0 0.0
  %67 = vmatprep.subr.mxu0 0.0
  %68 = vmatpush1.msra.mxu0 0.0
  %69 = vmatprep.subr.mxu0 0.0
  %70 = vmatpush1.msra.mxu0 0.0
  %71 = vmatprep.subr.mxu0 0.0
  %72 = vmatpush1.msra.mxu0 0.0
  %73 = vmatprep.subr.mxu0 0.0
  %74 = vmatpush1.msra.mxu0 0.0
  %75 = vmatprep.subr.mxu0 0.0
  %76 = vmatpush1.msra.mxu0 0.0
  %77 = vmatprep.subr.mxu0 0.0
  %78 = vmatpush1.msra.mxu0 0.0
  %79 = vmatprep.subr.mxu0 0.0
  %80 = vmatpush1.msra.mxu0 0.0
  %81 = vmatprep.subr.mxu0 0.0
  %82 = vmatpush1.msra.mxu0 0.0
  %83 = vmatprep.subr.mxu0 0.0
  %84 = vmatpush1.msra.mxu0 0.0
  %85 = vmatprep.subr.mxu0 0.0
  %86 = vmatpush1.msra.mxu0 0.0
  %87 = vmatprep.subr.mxu0 0.0
  %88 = vmatpush1.msra.mxu0 0.0
  %89 = vmatprep.subr.mxu0 0.0
  %90 = vmatpush1.msra.mxu0 0.0
  %91 = vmatprep.subr.mxu0 0.0
  %92 = vmatpush1.msra.mxu0 0.0
  %93 = vmatprep.subr.mxu0 0.0
  %94 = vmatpush1.msra.mxu0 0.0
  %95 = vmatprep.subr.mxu0 0.0
  %96 = vmatpush1.msra.mxu0 0.0
  %97 = vmatprep.subr.mxu0 0.0
  %98 = vmatpush1.msra.mxu0 0.0
  %99 = vmatprep.subr.mxu0 0.0
  %100 = vmatpush1.msra.mxu0 0.0
  %101 = vmatprep.subr.mxu0 0.0
  %102 = vmatpush1.msra.mxu0 0.0
  %103 = vmatprep.subr.mxu0 0.0
  %104 = vmatpush1.msra.mxu0 0.0
  %105 = vmatprep.subr.mxu0 0.0
  %106 = vmatpush1.msra.mxu0 0.0
  %107 = vmatprep.subr.mxu0 0.0
  %108 = vmatpush1.msra.mxu0 0.0
  %109 = vmatprep.mubr.f32.mxu0 0.0
  %110 = vmatmul.mubr.f32.gmra.mrb[0].mxu0 %v40
  %v111 = vpop.f32.mrb[0].mxu0
  %v112 = vadd.f32 0.0, %v111
  %v113 = vpop.f32.mrb[0].mxu0
  %114 = vmatprep.mubr.f32.mxu0 0.0
  %115 = vmatmul.mubr.f32.gmra.mrb[0].mxu0 %v43
  %v116 = vpop.f32.mrb[0].mxu0
  %v117 = vadd.f32 0.0, %v116
  %v118 = vpop.f32.mrb[0].mxu0
  %119 = vdwg.mxu0
  %v120 = vadd.f32 %v30, %v112
  %v121 = vadd.f32 %v31, %v117
  %122 = vst.msk [vmem:[#allocation2] sm:$0xff] %vm38, %v120
  %123 = vst.msk [vmem:[#allocation2 + $0x8] sm:$0xff] %vm38, %v121
  // Predicated region
  $region30: #{transformer_model_forward.14} parent=0 // pred_check
    %p124 = pneg %p23
  $region31: #{transformer_model_forward.14} parent=0 // pred_check_branch
    %126 = sbr.rel (%p124) target = $region33
  $region32: #{transformer_model_forward.14} parent=0 // pred_region
    %v127 = vld [vmem:[#allocation2] sm:$0xff]
    %v128 = vld [vmem:[#allocation2 + $0x8] sm:$0xff]
    %v129 = vld [vmem:[%s2] sm:$0x1]
    %v131 = vlaneseq
    %v132 = vshrl.u32 %v131, 7
    %v133 = vsub.s32 0, %v132
    %v134 = vrot.slane %v129, %v133
    %v136 = vadd.f32 %v127, %v134
    %v137 = vadd.f32 %v128, %v134
    %v138 = vld [vmem:[%s3] sm:$0xff]
    %v139 = vld [vmem:[%s3 + $0x8] sm:$0xff]
    %v140 = vadd.f32 %v136, %v138
    %v141 = vadd.f32 %v137, %v139
    %v142 = vsel %vm38, %v140, 0.0
    %143 = vadd.xlane.f32.xlu0 %v142
    %v144 = vpop.xlane.xlu0 %143
    %v145 = vsel %vm38, %v141, 0.0
    %146 = vadd.xlane.f32.xlu0 %v145
    %v147 = vpop.xlane.xlu0 %146
    %v148 = vrcp.pop 32.0
    %v149 = vmul.f32 %v144, %v148
    %v150 = vmul.f32 %v147, %v148
    %v151 = vsub.f32 %v140, %v149
    %v152 = vsub.f32 %v141, %v150
    %v153 = vmul.f32 %v151, %v151
    %v154 = vmul.f32 %v152, %v152
    %v155 = vsel %vm38, %v153, 0.0
    %156 = vadd.xlane.f32.xlu0 %v155
    %v157 = vpop.xlane.xlu0 %156
    %v158 = vsel %vm38, %v154, 0.0
    %159 = vadd.xlane.f32.xlu0 %v158
    %v160 = vpop.xlane.xlu0 %159
    %v161 = vmul.f32 %v157, %v148
    %v162 = vmul.f32 %v160, %v148
    %v163 = vadd.f32 %v161, 1e-12
    %v164 = vadd.f32 %v162, 1e-12
    %v165 = vrsqrt.pop %v163
    %v166 = vmul.f32 %v163, %v165
    %vm167 = vcmp.eq.f32.partialorder %v163, inf
    %v168 = vsel %vm167, %v163, %v166
    %vm169 = vcmp.eq.f32.partialorder %v163, 0.0
    %v170 = vand.u32 %v163, 2147483648
    %v171 = vsel %vm169, %v170, %v168
    %v172 = vrsqrt.pop %v164
    %v173 = vmul.f32 %v164, %v172
    %vm174 = vcmp.eq.f32.partialorder %v164, inf
    %v175 = vsel %vm174, %v164, %v173
    %vm176 = vcmp.eq.f32.partialorder %v164, 0.0
    %v177 = vand.u32 %v164, 2147483648
    %v178 = vsel %vm176, %v177, %v175
    %v179 = vrcp.pop %v171
    %v180 = vmul.f32 %v151, %v179
    %v181 = vrcp.pop %v178
    %v182 = vmul.f32 %v152, %v181
    %v183 = vld [vmem:[%s4] sm:$0x1]
    %v185 = vlaneseq
    %v186 = vshrl.u32 %v185, 7
    %v187 = vsub.s32 0, %v186
    %v188 = vrot.slane %v183, %v187
    %v190 = vmul.f32 %v188, %v180
    %v191 = vmul.f32 %v188, %v182
    %v192 = vld [vmem:[%s5] sm:$0x1]
    %v194 = vlaneseq
    %v195 = vshrl.u32 %v194, 7
    %v196 = vsub.s32 0, %v195
    %v197 = vrot.slane %v192, %v196
    %v199 = vadd.f32 %v190, %v197
    %v200 = vadd.f32 %v191, %v197
    %201 = vst.msk [vmem:[%s6] sm:$0xff] %vm38, %v199
    %202 = vst.msk [vmem:[%s6 + $0x8] sm:$0xff] %vm38, %v200
  $region33: #{transformer_model_forward.14} parent=0 // pred_fallthru
    _
  // Predicated region
  $region34: #{transformer_model_forward.14} parent=0 // pred_check
    _
  $region35: #{transformer_model_forward.14} parent=0 // pred_check_branch
    %204 = sbr.rel (0) target = $region37
  $region36: #{transformer_model_forward.14} parent=0 // pred_region
    _
  $region37: #{transformer_model_forward.14} parent=0 // pred_fallthru
    _
  // Predicated region
  $region38: #{transformer_model_forward.14} parent=0 // pred_check
    _
  $region39: #{transformer_model_forward.14} parent=0 // pred_check_branch
    %206 = sbr.rel (0) target = $region41
  $region40: #{transformer_model_forward.14} parent=0 // pred_region
    _
  $region41: #{transformer_model_forward.14} parent=0 // pred_fallthru
    _

// kernel: transformer_model_forward.15
$region0: #{transformer_model_forward.15}
  #allocation0 [shape = 'u32[]', space=smem, size = 0x4, offset = 0x4, fixed_abs, tag = 'smem constant byte address 0x4 - core index']
  #allocation1 [shape = 'u32[144,128]{1,0:T(1,128)}', space=vmem, size = 0x12000, scoped, tag = 'internal scratch']
  #allocation2 [shape = 'f32[16,64]{1,0:T(8,128)}', space=vmem, size = 0x2000, scoped, tag = 'scratch operand']
  %s0 = inlined_call_operand.vmem [shape: f32[16,32], index: 0, kind: input, shape index: {}]
  %s1 = inlined_call_operand.vmem [shape: f32[32,64], index: 1, kind: input, shape index: {}]
  %s2 = inlined_call_operand.vmem [shape: f32[1,64], index: 2, kind: input, shape index: {}]
  %s3 = inlined_call_operand.vmem [shape: f32[16,64], index: 3, kind: output, shape index: {}]
  %s4 = sld [smem:[#allocation0]]
  $region30: #{transformer_model_forward.15} parent=0
    _
  %s6 = ssub.s32 1, %s4
  %s7 = scalar_select 0, %s6, %s4
  // Predicated region
  $region2: #{transformer_model_forward.15} parent=0 // pred_check
    _
  $region3: #{transformer_model_forward.15} parent=0 // pred_check_branch
    %9 = sbr.rel (0) target = $region5
  $region4: #{transformer_model_forward.15} parent=0 // pred_region
    _
  $region5: #{transformer_model_forward.15} parent=0 // pred_fallthru
    _
  // Predicated region
  $region6: #{transformer_model_forward.15} parent=0 // pred_check
    _
  $region7: #{transformer_model_forward.15} parent=0 // pred_check_branch
    %11 = sbr.rel (0) target = $region9
  $region8: #{transformer_model_forward.15} parent=0 // pred_region
    _
  $region9: #{transformer_model_forward.15} parent=0 // pred_fallthru
    _
  // Predicated region
  $region10: #{transformer_model_forward.15} parent=0 // pred_check
    _
  $region11: #{transformer_model_forward.15} parent=0 // pred_check_branch
    %13 = sbr.rel (0) target = $region13
  $region12: #{transformer_model_forward.15} parent=0 // pred_region
    _
  $region13: #{transformer_model_forward.15} parent=0 // pred_fallthru
    _
  %p14 = scmp.eq.s32.totalorder 0, 0
  // Predicated region
  $region14: #{transformer_model_forward.15} parent=0 // pred_check
    %p15 = pneg %p14
  $region15: #{transformer_model_forward.15} parent=0 // pred_check_branch
    %17 = sbr.rel (%p15) target = $region17
  $region16: #{transformer_model_forward.15} parent=0 // pred_region
    %vm18 = vcmask 523264
    %19 = vst.msk [vmem:[#allocation2] sm:$0xff] %vm18, 0.0
    %20 = vst.msk [vmem:[#allocation2 + $0x8] sm:$0xff] %vm18, 0.0
  $region17: #{transformer_model_forward.15} parent=0 // pred_fallthru
    _
  %v21 = vld [vmem:[#allocation2] sm:$0xff]
  %v22 = vld [vmem:[#allocation2 + $0x8] sm:$0xff]
  %v23 = vld [vmem:[%s0] sm:$0xff]
  %v24 = vld [vmem:[%s0 + $0x8] sm:$0xff]
  %v25 = vld [vmem:[%s1] sm:$0xff]
  %v26 = vld [vmem:[%s1 + $0x8] sm:$0xff]
  %v27 = vld [vmem:[%s1 + $0x10] sm:$0xff]
  %v28 = vld [vmem:[%s1 + $0x18] sm:$0xff]
  %vm29 = vcmask 261120
  %v31 = vsel %vm29, %v23, 0
  %v34 = vsel %vm29, %v24, 0
  %36 = vmatprep.subr.mxu0 0.0
  %37 = vmatpush1.msra.mxu0 %v25
  %38 = vmatprep.subr.mxu0 0.0
  %39 = vmatpush1.msra.mxu0 %v26
  %40 = vmatprep.subr.mxu0 0.0
  %41 = vmatpush1.msra.mxu0 %v27
  %42 = vmatprep.subr.mxu0 0.0
  %43 = vmatpush1.msra.mxu0 %v28
  %44 = vmatprep.subr.mxu0 0.0
  %45 = vmatpush1.msra.mxu0 0.0
  %46 = vmatprep.subr.mxu0 0.0
  %47 = vmatpush1.msra.mxu0 0.0
  %48 = vmatprep.subr.mxu0 0.0
  %49 = vmatpush1.msra.mxu0 0.0
  %50 = vmatprep.subr.mxu0 0.0
  %51 = vmatpush1.msra.mxu0 0.0
  %52 = vmatprep.subr.mxu0 0.0
  %53 = vmatpush1.msra.mxu0 0.0
  %54 = vmatprep.subr.mxu0 0.0
  %55 = vmatpush1.msra.mxu0 0.0
  %56 = vmatprep.subr.mxu0 0.0
  %57 = vmatpush1.msra.mxu0 0.0
  %58 = vmatprep.subr.mxu0 0.0
  %59 = vmatpush1.msra.mxu0 0.0
  %60 = vmatprep.subr.mxu0 0.0
  %61 = vmatpush1.msra.mxu0 0.0
  %62 = vmatprep.subr.mxu0 0.0
  %63 = vmatpush1.msra.mxu0 0.0
  %64 = vmatprep.subr.mxu0 0.0
  %65 = vmatpush1.msra.mxu0 0.0
  %66 = vmatprep.subr.mxu0 0.0
  %67 = vmatpush1.msra.mxu0 0.0
  %68 = vmatprep.subr.mxu0 0.0
  %69 = vmatpush1.msra.mxu0 0.0
  %70 = vmatprep.subr.mxu0 0.0
  %71 = vmatpush1.msra.mxu0 0.0
  %72 = vmatprep.subr.mxu0 0.0
  %73 = vmatpush1.msra.mxu0 0.0
  %74 = vmatprep.subr.mxu0 0.0
  %75 = vmatpush1.msra.mxu0 0.0
  %76 = vmatprep.subr.mxu0 0.0
  %77 = vmatpush1.msra.mxu0 0.0
  %78 = vmatprep.subr.mxu0 0.0
  %79 = vmatpush1.msra.mxu0 0.0
  %80 = vmatprep.subr.mxu0 0.0
  %81 = vmatpush1.msra.mxu0 0.0
  %82 = vmatprep.subr.mxu0 0.0
  %83 = vmatpush1.msra.mxu0 0.0
  %84 = vmatprep.subr.mxu0 0.0
  %85 = vmatpush1.msra.mxu0 0.0
  %86 = vmatprep.subr.mxu0 0.0
  %87 = vmatpush1.msra.mxu0 0.0
  %88 = vmatprep.subr.mxu0 0.0
  %89 = vmatpush1.msra.mxu0 0.0
  %90 = vmatprep.subr.mxu0 0.0
  %91 = vmatpush1.msra.mxu0 0.0
  %92 = vmatprep.subr.mxu0 0.0
  %93 = vmatpush1.msra.mxu0 0.0
  %94 = vmatprep.subr.mxu0 0.0
  %95 = vmatpush1.msra.mxu0 0.0
  %96 = vmatprep.subr.mxu0 0.0
  %97 = vmatpush1.msra.mxu0 0.0
  %98 = vmatprep.subr.mxu0 0.0
  %99 = vmatpush1.msra.mxu0 0.0
  %100 = vmatprep.mubr.f32.mxu0 0.0
  %101 = vmatmul.mubr.f32.gmra.mrb[0].mxu0 %v31
  %v102 = vpop.f32.mrb[0].mxu0
  %v103 = vadd.f32 0.0, %v102
  %v104 = vpop.f32.mrb[0].mxu0
  %105 = vmatprep.mubr.f32.mxu0 0.0
  %106 = vmatmul.mubr.f32.gmra.mrb[0].mxu0 %v34
  %v107 = vpop.f32.mrb[0].mxu0
  %v108 = vadd.f32 0.0, %v107
  %v109 = vpop.f32.mrb[0].mxu0
  %110 = vdwg.mxu0
  %v111 = vadd.f32 %v21, %v103
  %v112 = vadd.f32 %v22, %v108
  %vm113 = vcmask 523264
  %114 = vst.msk [vmem:[#allocation2] sm:$0xff] %vm113, %v111
  %115 = vst.msk [vmem:[#allocation2 + $0x8] sm:$0xff] %vm113, %v112
  // Predicated region
  $region18: #{transformer_model_forward.15} parent=0 // pred_check
    %p116 = pneg %p14
  $region19: #{transformer_model_forward.15} parent=0 // pred_check_branch
    %118 = sbr.rel (%p116) target = $region21
  $region20: #{transformer_model_forward.15} parent=0 // pred_region
    %v119 = vld [vmem:[#allocation2] sm:$0xff]
    %v120 = vld [vmem:[#allocation2 + $0x8] sm:$0xff]
    %v121 = vld [vmem:[%s2] sm:$0x1]
    %v123 = vlaneseq
    %v124 = vshrl.u32 %v123, 7
    %v125 = vsub.s32 0, %v124
    %v126 = vrot.slane %v121, %v125
    %v128 = vadd.f32 %v119, %v126
    %v129 = vadd.f32 %v120, %v126
    %v130 = vmul.f32 %v128, 0.5
    %v131 = vmul.f32 %v129, 0.5
    %v132 = vrcp.pop 1.4142135
    %v133 = vmul.f32 %v128, %v132
    %v134 = vmul.f32 %v129, %v132
    %v135 = vand.u32 2147483647, %v133
    %v136 = vand.u32 2147483647, %v134
    %v137 = vmul.f32 %v135, 0.5
    %v138 = vmul.f32 %v136, 0.5
    %v139 = vadd.f32 %v137, 1.0
    %v140 = vadd.f32 %v138, 1.0
    %v141 = vrcp.pop %v139
    %v142 = vmul.f32 1.0, %v141
    %v143 = vrcp.pop %v140
    %v144 = vmul.f32 1.0, %v143
    %v145 = vmul.f32 %v142, 0.17087276
    %v146 = vmul.f32 %v144, 0.17087276
    %v147 = vadd.f32 %v145, -0.82215226
    %v148 = vadd.f32 %v146, -0.82215226
    %v149 = vmul.f32 %v142, %v147
    %v150 = vmul.f32 %v144, %v148
    %v151 = vadd.f32 %v149, 1.4885159
    %v152 = vadd.f32 %v150, 1.4885159
    %v153 = vmul.f32 %v142, %v151
    %v154 = vmul.f32 %v144, %v152
    %v155 = vadd.f32 %v153, -1.135204
    %v156 = vadd.f32 %v154, -1.135204
    %v157 = vmul.f32 %v142, %v155
    %v158 = vmul.f32 %v144, %v156
    %v159 = vadd.f32 %v157, 0.27886808
    %v160 = vadd.f32 %v158, 0.27886808
    %v161 = vmul.f32 %v142, %v159
    %v162 = vmul.f32 %v144, %v160
    %v163 = vadd.f32 %v161, -0.18628806
    %v164 = vadd.f32 %v162, -0.18628806
    %v165 = vmul.f32 %v142, %v163
    %v166 = vmul.f32 %v144, %v164
    %v167 = vadd.f32 %v165, 0.09678418
    %v168 = vadd.f32 %v166, 0.09678418
    %v169 = vmul.f32 %v142, %v167
    %v170 = vmul.f32 %v144, %v168
    %v171 = vadd.f32 %v169, 0.37409195
    %v172 = vadd.f32 %v170, 0.37409195
    %v173 = vmul.f32 %v142, %v171
    %v174 = vmul.f32 %v144, %v172
    %v175 = vadd.f32 %v173, 1.0000237
    %v176 = vadd.f32 %v174, 1.0000237
    %v177 = vmul.f32 %v142, %v175
    %v178 = vmul.f32 %v144, %v176
    %v179 = vadd.f32 %v177, -1.2655122
    %v180 = vadd.f32 %v178, -1.2655122
    %v181 = vsub.f32 0.0, %v135
    %v182 = vsub.f32 0.0, %v136
    %v183 = vmul.f32 %v181, %v135
    %v184 = vmul.f32 %v182, %v136
    %v185 = vadd.f32 %v183, %v179
    %v186 = vadd.f32 %v184, %v180
    %v187 = vmul.f32 %v185, 1.442695
    %v188 = vpow.pop %v187
    %v189 = vmul.f32 %v186, 1.442695
    %v190 = vpow.pop %v189
    %v191 = vmul.f32 %v142, %v188
    %v192 = vmul.f32 %v144, %v190
    %vm193 = vcmp.ge.f32.partialorder %v133, 0.0
    %vm194 = vcmp.ge.f32.partialorder %v134, 0.0
    %v195 = vsub.f32 1.0, %v191
    %v196 = vsub.f32 1.0, %v192
    %v197 = vsub.f32 %v191, 1.0
    %v198 = vsub.f32 %v192, 1.0
    %v199 = vsel %vm193, %v195, %v197
    %v200 = vsel %vm194, %v196, %v198
    %v201 = vadd.f32 %v199, 1.0
    %v202 = vadd.f32 %v200, 1.0
    %v203 = vmul.f32 %v130, %v201
    %v204 = vmul.f32 %v131, %v202
    %205 = vst.msk [vmem:[%s3] sm:$0xff] %vm113, %v203
    %206 = vst.msk [vmem:[%s3 + $0x8] sm:$0xff] %vm113, %v204
  $region21: #{transformer_model_forward.15} parent=0 // pred_fallthru
    _
  // Predicated region
  $region22: #{transformer_model_forward.15} parent=0 // pred_check
    _
  $region23: #{transformer_model_forward.15} parent=0 // pred_check_branch
    %208 = sbr.rel (0) target = $region25
  $region24: #{transformer_model_forward.15} parent=0 // pred_region
    _
  $region25: #{transformer_model_forward.15} parent=0 // pred_fallthru
    _
  // Predicated region
  $region26: #{transformer_model_forward.15} parent=0 // pred_check
    _
  $region27: #{transformer_model_forward.15} parent=0 // pred_check_branch
    %210 = sbr.rel (0) target = $region29
  $region28: #{transformer_model_forward.15} parent=0 // pred_region
    _
  $region29: #{transformer_model_forward.15} parent=0 // pred_fallthru
    _

// kernel: transformer_model_forward.16
$region0: #{transformer_model_forward.16}
  #allocation0 [shape = 'u32[]', space=smem, size = 0x4, offset = 0x4, fixed_abs, tag = 'smem constant byte address 0x4 - core index']
  #allocation1 [shape = 'u32[144,128]{1,0:T(1,128)}', space=vmem, size = 0x12000, scoped, tag = 'internal scratch']
  #allocation2 [shape = 'f32[16,32]{1,0:T(8,128)}', space=vmem, size = 0x2000, scoped, tag = 'scratch operand']
  %s0 = inlined_call_operand.vmem [shape: f32[16,64], index: 0, kind: input, shape index: {}]
  %s1 = inlined_call_operand.vmem [shape: f32[64,32], index: 1, kind: input, shape index: {}]
  %s2 = inlined_call_operand.vmem [shape: f32[1,32], index: 2, kind: input, shape index: {}]
  %s3 = inlined_call_operand.vmem [shape: f32[16,32], index: 3, kind: input, shape index: {}]
  %s4 = inlined_call_operand.vmem [shape: f32[1,32], index: 4, kind: input, shape index: {}]
  %s5 = inlined_call_operand.vmem [shape: f32[1,32], index: 5, kind: input, shape index: {}]
  %s6 = inlined_call_operand.vmem [shape: f32[16,32], index: 6, kind: output, shape index: {}]
  %s7 = sld [smem:[#allocation0]]
  $region42: #{transformer_model_forward.16} parent=0
    _
  %s9 = ssub.s32 1, %s7
  %s10 = scalar_select 0, %s9, %s7
  // Predicated region
  $region2: #{transformer_model_forward.16} parent=0 // pred_check
    _
  $region3: #{transformer_model_forward.16} parent=0 // pred_check_branch
    %12 = sbr.rel (0) target = $region5
  $region4: #{transformer_model_forward.16} parent=0 // pred_region
    _
  $region5: #{transformer_model_forward.16} parent=0 // pred_fallthru
    _
  // Predicated region
  $region6: #{transformer_model_forward.16} parent=0 // pred_check
    _
  $region7: #{transformer_model_forward.16} parent=0 // pred_check_branch
    %14 = sbr.rel (0) target = $region9
  $region8: #{transformer_model_forward.16} parent=0 // pred_region
    _
  $region9: #{transformer_model_forward.16} parent=0 // pred_fallthru
    _
  // Predicated region
  $region10: #{transformer_model_forward.16} parent=0 // pred_check
    _
  $region11: #{transformer_model_forward.16} parent=0 // pred_check_branch
    %16 = sbr.rel (0) target = $region13
  $region12: #{transformer_model_forward.16} parent=0 // pred_region
    _
  $region13: #{transformer_model_forward.16} parent=0 // pred_fallthru
    _
  // Predicated region
  $region14: #{transformer_model_forward.16} parent=0 // pred_check
    _
  $region15: #{transformer_model_forward.16} parent=0 // pred_check_branch
    %18 = sbr.rel (0) target = $region17
  $region16: #{transformer_model_forward.16} parent=0 // pred_region
    _
  $region17: #{transformer_model_forward.16} parent=0 // pred_fallthru
    _
  // Predicated region
  $region18: #{transformer_model_forward.16} parent=0 // pred_check
    _
  $region19: #{transformer_model_forward.16} parent=0 // pred_check_branch
    %20 = sbr.rel (0) target = $region21
  $region20: #{transformer_model_forward.16} parent=0 // pred_region
    _
  $region21: #{transformer_model_forward.16} parent=0 // pred_fallthru
    _
  // Predicated region
  $region22: #{transformer_model_forward.16} parent=0 // pred_check
    _
  $region23: #{transformer_model_forward.16} parent=0 // pred_check_branch
    %22 = sbr.rel (0) target = $region25
  $region24: #{transformer_model_forward.16} parent=0 // pred_region
    _
  $region25: #{transformer_model_forward.16} parent=0 // pred_fallthru
    _
  %p23 = scmp.eq.s32.totalorder 0, 0
  // Predicated region
  $region26: #{transformer_model_forward.16} parent=0 // pred_check
    %p24 = pneg %p23
  $region27: #{transformer_model_forward.16} parent=0 // pred_check_branch
    %26 = sbr.rel (%p24) target = $region29
  $region28: #{transformer_model_forward.16} parent=0 // pred_region
    %vm27 = vcmask 261120
    %28 = vst.msk [vmem:[#allocation2] sm:$0xff] %vm27, 0.0
    %29 = vst.msk [vmem:[#allocation2 + $0x8] sm:$0xff] %vm27, 0.0
  $region29: #{transformer_model_forward.16} parent=0 // pred_fallthru
    _
  %v30 = vld [vmem:[#allocation2] sm:$0xff]
  %v31 = vld [vmem:[#allocation2 + $0x8] sm:$0xff]
  %v32 = vld [vmem:[%s0] sm:$0xff]
  %v33 = vld [vmem:[%s0 + $0x8] sm:$0xff]
  %v34 = vld [vmem:[%s1] sm:$0xff]
  %v35 = vld [vmem:[%s1 + $0x8] sm:$0xff]
  %v36 = vld [vmem:[%s1 + $0x10] sm:$0xff]
  %v37 = vld [vmem:[%s1 + $0x18] sm:$0xff]
  %v38 = vld [vmem:[%s1 + $0x20] sm:$0xff]
  %v39 = vld [vmem:[%s1 + $0x28] sm:$0xff]
  %v40 = vld [vmem:[%s1 + $0x30] sm:$0xff]
  %v41 = vld [vmem:[%s1 + $0x38] sm:$0xff]
  %vm42 = vcmask 523264
  %v44 = vsel %vm42, %v32, 0
  %v47 = vsel %vm42, %v33, 0
  %49 = vmatprep.subr.mxu0 0.0
  %50 = vmatpush1.msra.mxu0 %v34
  %51 = vmatprep.subr.mxu0 0.0
  %52 = vmatpush1.msra.mxu0 %v35
  %53 = vmatprep.subr.mxu0 0.0
  %54 = vmatpush1.msra.mxu0 %v36
  %55 = vmatprep.subr.mxu0 0.0
  %56 = vmatpush1.msra.mxu0 %v37
  %57 = vmatprep.subr.mxu0 0.0
  %58 = vmatpush1.msra.mxu0 %v38
  %59 = vmatprep.subr.mxu0 0.0
  %60 = vmatpush1.msra.mxu0 %v39
  %61 = vmatprep.subr.mxu0 0.0
  %62 = vmatpush1.msra.mxu0 %v40
  %63 = vmatprep.subr.mxu0 0.0
  %64 = vmatpush1.msra.mxu0 %v41
  %65 = vmatprep.subr.mxu0 0.0
  %66 = vmatpush1.msra.mxu0 0.0
  %67 = vmatprep.subr.mxu0 0.0
  %68 = vmatpush1.msra.mxu0 0.0
  %69 = vmatprep.subr.mxu0 0.0
  %70 = vmatpush1.msra.mxu0 0.0
  %71 = vmatprep.subr.mxu0 0.0
  %72 = vmatpush1.msra.mxu0 0.0
  %73 = vmatprep.subr.mxu0 0.0
  %74 = vmatpush1.msra.mxu0 0.0
  %75 = vmatprep.subr.mxu0 0.0
  %76 = vmatpush1.msra.mxu0 0.0
  %77 = vmatprep.subr.mxu0 0.0
  %78 = vmatpush1.msra.mxu0 0.0
  %79 = vmatprep.subr.mxu0 0.0
  %80 = vmatpush1.msra.mxu0 0.0
  %81 = vmatprep.subr.mxu0 0.0
  %82 = vmatpush1.msra.mxu0 0.0
  %83 = vmatprep.subr.mxu0 0.0
  %84 = vmatpush1.msra.mxu0 0.0
  %85 = vmatprep.subr.mxu0 0.0
  %86 = vmatpush1.msra.mxu0 0.0
  %87 = vmatprep.subr.mxu0 0.0
  %88 = vmatpush1.msra.mxu0 0.0
  %89 = vmatprep.subr.mxu0 0.0
  %90 = vmatpush1.msra.mxu0 0.0
  %91 = vmatprep.subr.mxu0 0.0
  %92 = vmatpush1.msra.mxu0 0.0
  %93 = vmatprep.subr.mxu0 0.0
  %94 = vmatpush1.msra.mxu0 0.0
  %95 = vmatprep.subr.mxu0 0.0
  %96 = vmatpush1.msra.mxu0 0.0
  %97 = vmatprep.subr.mxu0 0.0
  %98 = vmatpush1.msra.mxu0 0.0
  %99 = vmatprep.subr.mxu0 0.0
  %100 = vmatpush1.msra.mxu0 0.0
  %101 = vmatprep.subr.mxu0 0.0
  %102 = vmatpush1.msra.mxu0 0.0
  %103 = vmatprep.subr.mxu0 0.0
  %104 = vmatpush1.msra.mxu0 0.0
  %105 = vmatprep.subr.mxu0 0.0
  %106 = vmatpush1.msra.mxu0 0.0
  %107 = vmatprep.subr.mxu0 0.0
  %108 = vmatpush1.msra.mxu0 0.0
  %109 = vmatprep.subr.mxu0 0.0
  %110 = vmatpush1.msra.mxu0 0.0
  %111 = vmatprep.subr.mxu0 0.0
  %112 = vmatpush1.msra.mxu0 0.0
  %113 = vmatprep.mubr.f32.mxu0 0.0
  %114 = vmatmul.mubr.f32.gmra.mrb[0].mxu0 %v44
  %v115 = vpop.f32.mrb[0].mxu0
  %v116 = vadd.f32 0.0, %v115
  %v117 = vpop.f32.mrb[0].mxu0
  %118 = vmatprep.mubr.f32.mxu0 0.0
  %119 = vmatmul.mubr.f32.gmra.mrb[0].mxu0 %v47
  %v120 = vpop.f32.mrb[0].mxu0
  %v121 = vadd.f32 0.0, %v120
  %v122 = vpop.f32.mrb[0].mxu0
  %123 = vdwg.mxu0
  %v124 = vadd.f32 %v30, %v116
  %v125 = vadd.f32 %v31, %v121
  %vm126 = vcmask 261120
  %127 = vst.msk [vmem:[#allocation2] sm:$0xff] %vm126, %v124
  %128 = vst.msk [vmem:[#allocation2 + $0x8] sm:$0xff] %vm126, %v125
  // Predicated region
  $region30: #{transformer_model_forward.16} parent=0 // pred_check
    %p129 = pneg %p23
  $region31: #{transformer_model_forward.16} parent=0 // pred_check_branch
    %131 = sbr.rel (%p129) target = $region33
  $region32: #{transformer_model_forward.16} parent=0 // pred_region
    %v132 = vld [vmem:[#allocation2] sm:$0xff]
    %v133 = vld [vmem:[#allocation2 + $0x8] sm:$0xff]
    %v134 = vld [vmem:[%s2] sm:$0x1]
    %v136 = vlaneseq
    %v137 = vshrl.u32 %v136, 7
    %v138 = vsub.s32 0, %v137
    %v139 = vrot.slane %v134, %v138
    %v141 = vadd.f32 %v132, %v139
    %v142 = vadd.f32 %v133, %v139
    %v143 = vld [vmem:[%s3] sm:$0xff]
    %v144 = vld [vmem:[%s3 + $0x8] sm:$0xff]
    %v145 = vadd.f32 %v141, %v143
    %v146 = vadd.f32 %v142, %v144
    %v147 = vsel %vm126, %v145, 0.0
    %148 = vadd.xlane.f32.xlu0 %v147
    %v149 = vpop.xlane.xlu0 %148
    %v150 = vsel %vm126, %v146, 0.0
    %151 = vadd.xlane.f32.xlu0 %v150
    %v152 = vpop.xlane.xlu0 %151
    %v153 = vrcp.pop 32.0
    %v154 = vmul.f32 %v149, %v153
    %v155 = vmul.f32 %v152, %v153
    %v156 = vsub.f32 %v145, %v154
    %v157 = vsub.f32 %v146, %v155
    %v158 = vmul.f32 %v156, %v156
    %v159 = vmul.f32 %v157, %v157
    %v160 = vsel %vm126, %v158, 0.0
    %161 = vadd.xlane.f32.xlu0 %v160
    %v162 = vpop.xlane.xlu0 %161
    %v163 = vsel %vm126, %v159, 0.0
    %164 = vadd.xlane.f32.xlu0 %v163
    %v165 = vpop.xlane.xlu0 %164
    %v166 = vmul.f32 %v162, %v153
    %v167 = vmul.f32 %v165, %v153
    %v168 = vadd.f32 %v166, 1e-12
    %v169 = vadd.f32 %v167, 1e-12
    %v170 = vrsqrt.pop %v168
    %v171 = vmul.f32 %v168, %v170
    %vm172 = vcmp.eq.f32.partialorder %v168, inf
    %v173 = vsel %vm172, %v168, %v171
    %vm174 = vcmp.eq.f32.partialorder %v168, 0.0
    %v175 = vand.u32 %v168, 2147483648
    %v176 = vsel %vm174, %v175, %v173
    %v177 = vrsqrt.pop %v169
    %v178 = vmul.f32 %v169, %v177
    %vm179 = vcmp.eq.f32.partialorder %v169, inf
    %v180 = vsel %vm179, %v169, %v178
    %vm181 = vcmp.eq.f32.partialorder %v169, 0.0
    %v182 = vand.u32 %v169, 2147483648
    %v183 = vsel %vm181, %v182, %v180
    %v184 = vrcp.pop %v176
    %v185 = vmul.f32 %v156, %v184
    %v186 = vrcp.pop %v183
    %v187 = vmul.f32 %v157, %v186
    %v188 = vld [vmem:[%s4] sm:$0x1]
    %v190 = vlaneseq
    %v191 = vshrl.u32 %v190, 7
    %v192 = vsub.s32 0, %v191
    %v193 = vrot.slane %v188, %v192
    %v195 = vmul.f32 %v193, %v185
    %v196 = vmul.f32 %v193, %v187
    %v197 = vld [vmem:[%s5] sm:$0x1]
    %v199 = vlaneseq
    %v200 = vshrl.u32 %v199, 7
    %v201 = vsub.s32 0, %v200
    %v202 = vrot.slane %v197, %v201
    %v204 = vadd.f32 %v195, %v202
    %v205 = vadd.f32 %v196, %v202
    %206 = vst.msk [vmem:[%s6] sm:$0xff] %vm126, %v204
    %207 = vst.msk [vmem:[%s6 + $0x8] sm:$0xff] %vm126, %v205
  $region33: #{transformer_model_forward.16} parent=0 // pred_fallthru
    _
  // Predicated region
  $region34: #{transformer_model_forward.16} parent=0 // pred_check
    _
  $region35: #{transformer_model_forward.16} parent=0 // pred_check_branch
    %209 = sbr.rel (0) target = $region37
  $region36: #{transformer_model_forward.16} parent=0 // pred_region
    _
  $region37: #{transformer_model_forward.16} parent=0 // pred_fallthru
    _
  // Predicated region
  $region38: #{transformer_model_forward.16} parent=0 // pred_check
    _
  $region39: #{transformer_model_forward.16} parent=0 // pred_check_branch
    %211 = sbr.rel (0) target = $region41
  $region40: #{transformer_model_forward.16} parent=0 // pred_region
    _
  $region41: #{transformer_model_forward.16} parent=0 // pred_fallthru
    _

</llo_original>
